<compile_context>
chip_gen: v5e
topology: v5e:2x2
jax: 0.10.0
libtpu: 0.0.40
codegen_flags: <defaults>
</compile_context>

<pallas_src>
import jax
import jax.numpy as jnp
from jax.experimental import pallas as pl
from jax.experimental.pallas import tpu as pltpu

LANE = 128
SUBLANE_BF16 = 16
VMEM_LIMIT = 32 * 1024 * 1024          # safe on v5e/v6e (128 MiB) and v7x (64 MiB/TC)
TILE_VMEM_BUDGET = 20 * 1024 * 1024    # budget for pipelined blocks + f32 temps


# ----------------------------- Pallas kernels -------------------------------- #
def ms_cam_kernel(x_ref, g_ref, w1_ref, b1_ref, w2_ref, o_ref):
    """One (t_hw, C) spatial tile of one batch element.

    x_ref : (1, t_hw, C)  bf16  input activations (channels-last)
    g_ref : (1, 1, C)     f32   precomputed global-branch gate offset
                                 (= global_att(x) + local conv2 bias)
    w1_ref: (C, Ci_p)     bf16  local conv1 weight (BN folded, lane-padded)
    b1_ref: (1, Ci_p)     f32   local conv1 bias   (BN folded, lane-padded)
    w2_ref: (Ci_p, C)     bf16  local conv2 weight (BN folded, lane-padded rows)
    o_ref : (1, t_hw, C)  bf16  output tile
    """
    x = x_ref[0]                                                       # (t_hw, C) bf16

    # local branch: 1x1 conv -> ReLU -> 1x1 conv (MXU, f32 accumulation)
    hl = jnp.dot(x, w1_ref[...], preferred_element_type=jnp.float32) + b1_ref[...]
    hl = jnp.maximum(hl, 0.0).astype(jnp.bfloat16)                     # (t_hw, Ci_p)
    xl = jnp.dot(hl, w2_ref[...], preferred_element_type=jnp.float32)  # (t_hw, C)

    # fuse with the precomputed global branch; element-wise math in f32 (v5e-safe)
    wei = jax.nn.sigmoid(xl + g_ref[0])                                # (t_hw, C) f32
    o_ref[0] = (x.astype(jnp.float32) * wei).astype(o_ref.dtype)


def pool_cast_kernel(x_ref, xb_ref, sum_ref):
    """Fused prepass: bf16 copy of x + per-batch channel sums in one HBM pass.

    x_ref  : (1, t_pre, C) f32   input tile
    xb_ref : (1, t_pre, C) bf16  bf16 copy (consumed by the main kernel)
    sum_ref: (1, 1, C)     f32   running channel sums (resident across the
                                 spatial "arbitrary" axis, written back per batch)
    """
    x = x_ref[0]                                                       # (t_pre, C) f32
    xb_ref[0] = x.astype(jnp.bfloat16)

    @pl.when(pl.program_id(1) == 0)
    def _():
        sum_ref[...] = jnp.zeros_like(sum_ref)

    sum_ref[0] += jnp.sum(x, axis=0, keepdims=True)                    # (1, C)


# ------------------------------- helpers ------------------------------------ #
def fold_conv_bn(w, b, gamma, beta, mean, var, eps=1e-5):
    """Fold Conv2d(1x1) + BatchNorm2d (eval mode) into a single affine.

    w: (Cout, Cin), b: (Cout,).  Returns W' (Cin, Cout) for `x @ W'` and b' (1, Cout).
    """
    s = gamma / jnp.sqrt(var + eps)                  # (Cout,)
    w_folded = (w * s[:, None]).T                    # (Cin, Cout)
    b_folded = (b * s + beta - mean * s)[None, :]    # (1, Cout)
    return w_folded.astype(jnp.float32), b_folded.astype(jnp.float32)


def _round_up(x, m):
    return ((x + m - 1) // m) * m


def _pad_to_lanes(a, axis, mult=LANE):
    pad = (-a.shape[axis]) % mult
    if pad == 0:
        return a
    widths = [(0, 0)] * a.ndim
    widths[axis] = (0, pad)
    return jnp.pad(a, widths)


def _pick_hw_tile(hw, n, c, ci_p, const_bytes=0):
    """VMEM-budget-aware HW tile: multiple of 16, ~0.5-1 MiB bf16 blocks,
    >= 2 total grid steps when N == 1 (v7x megacore), divisor of HW preferred."""
    budget = max(1 << 20, TILE_VMEM_BUDGET - 2 * const_bytes)
    # per HW-row VMEM: double-buffered bf16 in/out blocks (8C B) + in-body f32
    # temps (hl: ci_p, xl/wei/x_f32: 3C)  ->  4*(ci_p + 3C) B
    per_row = 8 * c + 4 * (ci_p + 3 * c)
    max_tile = max(256, (1 << 20) // (2 * c))        # keep bf16 blocks <= ~1 MiB
    t = max(SUBLANE_BF16, min(budget // per_row, max_tile))
    if n == 1 and hw > SUBLANE_BF16:
        # keep >= 2 spatial steps so both v7x TensorCores get work
        t = min(t, _round_up((hw + 1) // 2, SUBLANE_BF16))
    t = min(t, _round_up(hw, SUBLANE_BF16))
    t = max(SUBLANE_BF16, (t // SUBLANE_BF16) * SUBLANE_BF16)
    # prefer a nearby exact divisor of HW (avoids the zero-padding copy)
    cand = t
    while cand >= max(SUBLANE_BF16, (t * 3) // 4):
        if hw % cand == 0:
            return cand
        cand -= SUBLANE_BF16
    return t


def _prepass_tile(hw, c):
    """Exact-divisor tile for the streaming prepass (None -> use JAX fallback)."""
    cap = max(8, TILE_VMEM_BUDGET // (12 * c))       # dbl-buffered f32 in + bf16 out
    best, i = None, 1
    while i * i <= hw:
        if hw % i == 0:
            for d in (i, hw // i):
                if d <= cap and d % 8 == 0 and (best is None or d > best):
                    best = d
        i += 1
    if best is not None:
        return best
    if hw <= cap:
        return hw                                    # block == full dim (always legal)
    return None


def _pool_and_cast(x_f32):
    """One streaming pass over f32 x: returns (x_bf16, per-batch channel mean)."""
    N, HW, C = x_f32.shape
    t_pre = _prepass_tile(HW, C)
    if t_pre is None:
        # rare fallback (huge HW with no usable divisor): plain JAX
        xb = x_f32.astype(jnp.bfloat16)
        return xb, jnp.mean(xb, axis=1, dtype=jnp.float32)

    xb, sums = pl.pallas_call(
        pool_cast_kernel,
        out_shape=(
            jax.ShapeDtypeStruct((N, HW, C), jnp.bfloat16),
            jax.ShapeDtypeStruct((N, 1, C), jnp.float32),
        ),
        grid_spec=pltpu.PrefetchScalarGridSpec(
            num_scalar_prefetch=0,
            grid=(N, HW // t_pre),
            in_specs=[pl.BlockSpec((1, t_pre, C), lambda n, s: (n, s, 0))],
            out_specs=[
                pl.BlockSpec((1, t_pre, C), lambda n, s: (n, s, 0)),
                pl.BlockSpec((1, 1, C), lambda n, s: (n, 0, 0)),
            ],
        ),
        compiler_params=pltpu.CompilerParams(
            dimension_semantics=("parallel", "arbitrary"),
            vmem_limit_bytes=VMEM_LIMIT,
        ),
    )(x_f32)
    return xb, sums[:, 0, :] * (1.0 / float(HW))


# ------------------------------- wrappers ------------------------------------ #
def ms_cam_forward_nhwc(x_nhwc, params):
    """MS_CAM forward on channels-last input (N, H, W, C). Output is bf16 NHWC."""
    N, H, W, C = x_nhwc.shape
    HW = H * W
    x = x_nhwc.reshape(N, HW, C)
    inter = params["w1l"].shape[1]

    # ---- lane-pad inter_channels to the next multiple of 128 (and no further)
    w1 = _pad_to_lanes(params["w1l"], 1).astype(jnp.bfloat16)             # (C, Ci_p)
    b1 = _pad_to_lanes(params["b1l"], 1).astype(jnp.float32)              # (1, Ci_p)
    w2 = _pad_to_lanes(params["w2l"], 0).astype(jnp.bfloat16)             # (Ci_p, C)
    ci_p = w1.shape[1]
    w_bytes = w1.size * 2 + w2.size * 2 + b1.size * 4

    # ---- bf16 activations + global-branch pooling in a single HBM pass
    if x.dtype == jnp.bfloat16:
        x_bf16 = x
        pooled = jnp.mean(x, axis=1, dtype=jnp.float32)                   # (N, C)
    else:
        x_bf16, pooled = _pool_and_cast(x.astype(jnp.float32))

    # ---- global branch tail: tiny (N, C) matmuls, plain JAX f32; fold the local
    # conv2 bias into the gate -> single broadcast add in-kernel
    hg = jnp.maximum(pooled @ params["w1g"] + params["b1g"], 0.0)         # (N, Ci)
    xg = hg @ params["w2g"] + params["b2g"]                               # (N, C)
    g = (xg + params["b2l"]).astype(jnp.float32)[:, None, :]              # (N, 1, C)

    # ---- spatial tiling (pad HW to a tile multiple if needed; padded rows are
    # zero so out = 0 * sigmoid(bias terms) = 0 and we slice them off afterwards)
    t_hw = _pick_hw_tile(HW, N, C, ci_p, const_bytes=w_bytes)
    HW_pad = _round_up(HW, t_hw)
    if HW_pad != HW:
        x_bf16 = jnp.pad(x_bf16, ((0, 0), (0, HW_pad - HW), (0, 0)))
    grid = (N, HW_pad // t_hw)

    # constant operands: single-buffer only when they are big enough to matter
    # (reclaims VMEM under the v7x 64 MiB budget); tiny weights keep the default.
    const_kwargs = {"pipeline_mode": pl.Buffered(1)} if w_bytes >= (2 << 20) else {}

    cost = pl.CostEstimate(
        flops=int(4 * N * HW * C * inter),            # useful FLOPs (unpadded inter)
        transcendentals=int(N * HW * C),              # sigmoid
        bytes_accessed=int(4 * N * HW_pad * C + 2 * (w1.size + w2.size)),
    )

    out = pl.pallas_call(
        ms_cam_kernel,
        out_shape=jax.ShapeDtypeStruct((N, HW_pad, C), jnp.bfloat16),
        grid_spec=pltpu.PrefetchScalarGridSpec(
            num_scalar_prefetch=0,
            grid=grid,
            in_specs=[
                pl.BlockSpec((1, t_hw, C), lambda n, s: (n, s, 0)),          # x tile
                pl.BlockSpec((1, 1, C), lambda n, s: (n, 0, 0)),             # gate
                pl.BlockSpec((C, ci_p), lambda n, s: (0, 0), **const_kwargs),  # w1
                pl.BlockSpec((1, ci_p), lambda n, s: (0, 0), **const_kwargs),  # b1
                pl.BlockSpec((ci_p, C), lambda n, s: (0, 0), **const_kwargs),  # w2
            ],
            out_specs=pl.BlockSpec((1, t_hw, C), lambda n, s: (n, s, 0)),
        ),
        compiler_params=pltpu.CompilerParams(
            dimension_semantics=("parallel", "parallel"),
            vmem_limit_bytes=VMEM_LIMIT,
        ),
        cost_estimate=cost,
    )(x_bf16, g, w1, b1, w2)

    if HW_pad != HW:
        out = out[:, :HW, :]
    return out.reshape(N, H, W, C)


def ms_cam_forward(x_nchw, params):
    """NCHW compatibility wrapper (matches the PyTorch module interface).

    Casts to bf16 *before* transposing so each transpose moves 2 B/elem, not 4.
    # TODO(synk): keep activations NHWC end-to-end (or add an NCHW-native kernel
    # variant blocking (1, C, t_hw)) to remove these transposes entirely.
    """
    x_nhwc = jnp.transpose(x_nchw.astype(jnp.bfloat16), (0, 2, 3, 1))
    out_nhwc = ms_cam_forward_nhwc(x_nhwc, params)
    return jnp.transpose(out_nhwc, (0, 3, 1, 2))


# ----------------------------- params & reference ---------------------------- #
def make_params(key, channels, r):
    """Deterministic synthetic parameters (conv + eval-mode BN, folded)."""
    inter = channels // r
    keys = jax.random.split(key, 24)
    k = iter(keys)

    def conv_bn(cin, cout):
        w = 0.1 * jax.random.normal(next(k), (cout, cin), jnp.float32)
        b = 0.1 * jax.random.normal(next(k), (cout,), jnp.float32)
        gamma = 1.0 + 0.1 * jax.random.normal(next(k), (cout,), jnp.float32)
        beta = 0.1 * jax.random.normal(next(k), (cout,), jnp.float32)
        mean = 0.1 * jax.random.normal(next(k), (cout,), jnp.float32)
        var = jnp.abs(jax.random.normal(next(k), (cout,), jnp.float32)) + 0.5
        return fold_conv_bn(w, b, gamma, beta, mean, var)

    w1l, b1l = conv_bn(channels, inter)   # local_att conv1+bn1
    w2l, b2l = conv_bn(inter, channels)   # local_att conv2+bn2
    w1g, b1g = conv_bn(channels, inter)   # global_att conv1+bn1
    w2g, b2g = conv_bn(inter, channels)   # global_att conv2+bn2
    return dict(w1l=w1l, b1l=b1l, w2l=w2l, b2l=b2l,
                w1g=w1g, b1g=b1g, w2g=w2g, b2g=b2g)


def ms_cam_reference_nhwc(x_nhwc, params):
    """Pure-JAX f32 reference (same folded-BN eval semantics) for validation."""
    N, H, W, C = x_nhwc.shape
    x = x_nhwc.reshape(N, H * W, C).astype(jnp.float32)
    hl = jnp.maximum(x @ params["w1l"] + params["b1l"], 0.0)
    xl = hl @ params["w2l"] + params["b2l"]
    pooled = jnp.mean(x, axis=1, keepdims=True)
    hg = jnp.maximum(pooled @ params["w1g"] + params["b1g"], 0.0)
    xg = hg @ params["w2g"] + params["b2g"]
    out = x * jax.nn.sigmoid(xl + xg)
    return out.reshape(N, H, W, C)


def ms_cam_reference(x_nchw, params):
    out = ms_cam_reference_nhwc(
        jnp.transpose(x_nchw, (0, 2, 3, 1)).astype(jnp.float32), params)
    return jnp.transpose(out, (0, 3, 1, 2))


if __name__ == "__main__":
    key = jax.random.PRNGKey(0)
    k1, k2, k3, k4 = jax.random.split(key, 4)

    # Test 1: NCHW wrapper path (module defaults channels=64, r=4).  Exercises the
    # bf16-before-transpose path and the plain bf16 pooling branch.
    C1, r1, N1, H1, W1 = 64, 4, 2, 16, 16
    x1 = jax.random.normal(k1, (N1, C1, H1, W1), jnp.float32)
    p1 = make_params(k2, C1, r1)
    out1 = jax.block_until_ready(jax.jit(ms_cam_forward)(x1, p1))
    ref1 = ms_cam_reference(x1, p1)
    assert out1.shape == x1.shape
    assert jnp.allclose(out1.astype(jnp.float32), ref1, atol=5e-2, rtol=5e-2), \
        "NCHW path mismatch vs JAX reference"

    # Test 2: NHWC path with f32 input on a 7x7 map.  Exercises the fused
    # pool+cast prepass kernel, the N == 1 (>=2 grid steps) cap and the HW
    # zero-padding + slice-off path.
    C2, r2, N2, H2, W2 = 64, 4, 1, 7, 7
    x2 = jax.random.normal(k3, (N2, H2, W2, C2), jnp.float32)
    p2 = make_params(k4, C2, r2)
    out2 = jax.block_until_ready(jax.jit(ms_cam_forward_nhwc)(x2, p2))
    ref2 = ms_cam_reference_nhwc(x2, p2)
    assert out2.shape == x2.shape
    assert jnp.allclose(out2.astype(jnp.float32), ref2, atol=5e-2, rtol=5e-2), \
        "NHWC path mismatch vs JAX reference"

    print("KERNEL_OK")
</pallas_src>

<mosaic_0001>
module attributes {stable_mosaic.version = 11 : i64} {
  func.func @ms_cam_kernel(%arg0: i32, %arg1: i32, %arg2: memref<1x256x64xbf16, #tpu.memory_space<vmem>>, %arg3: memref<1x1x64xf32, #tpu.memory_space<vmem>>, %arg4: memref<64x128xbf16, #tpu.memory_space<vmem>>, %arg5: memref<1x128xf32, #tpu.memory_space<vmem>>, %arg6: memref<128x64xbf16, #tpu.memory_space<vmem>>, %arg7: memref<1x256x64xbf16, #tpu.memory_space<vmem>>) attributes {dimension_semantics = [#tpu.dimension_semantics<parallel>, #tpu.dimension_semantics<parallel>], iteration_bounds = array<i64: 2, 1>, scalar_prefetch = 0 : i64, scratch_operands = 0 : i64, tpu.core_type = #tpu.core_type<tc>, window_params = [{transform_indices = @transform_0, window_bounds = array<i64: 1, 256, 64>}, {transform_indices = @transform_1, window_bounds = array<i64: 1, 1, 64>}, {pipeline_mode = #tpu.pipeline_mode<synchronous>, transform_indices = @transform_2, window_bounds = array<i64: 64, 128>}, {pipeline_mode = #tpu.pipeline_mode<synchronous>, transform_indices = @transform_3, window_bounds = array<i64: 1, 128>}, {pipeline_mode = #tpu.pipeline_mode<synchronous>, transform_indices = @transform_4, window_bounds = array<i64: 128, 64>}, {transform_indices = @transform_5, window_bounds = array<i64: 1, 256, 64>}]} {
    %c0 = arith.constant 0 : index
    %c0_0 = arith.constant 0 : index
    %c0_1 = arith.constant 0 : index
    %0 = vector.load %arg2[%c0, %c0_0, %c0_1] : memref<1x256x64xbf16, #tpu.memory_space<vmem>>, vector<1x256x64xbf16>
    %1 = vector.shape_cast %0 : vector<1x256x64xbf16> to vector<256x64xbf16>
    %c0_2 = arith.constant 0 : index
    %c0_3 = arith.constant 0 : index
    %2 = vector.load %arg4[%c0_2, %c0_3] : memref<64x128xbf16, #tpu.memory_space<vmem>>, vector<64x128xbf16>
    %cst = arith.constant dense<0.000000e+00> : vector<256x128xf32>
    %3 = tpu.matmul %1, %2, %cst {dimension_numbers = #tpu.dot_dimension_numbers<[1], [0], [0], [1], [0, 0, 1, 1], [], []>} : vector<256x64xbf16>, vector<64x128xbf16>, vector<256x128xf32> -> vector<256x128xf32>
    %c0_4 = arith.constant 0 : index
    %c0_5 = arith.constant 0 : index
    %4 = vector.load %arg5[%c0_4, %c0_5] : memref<1x128xf32, #tpu.memory_space<vmem>>, vector<1x128xf32>
    %5 = vector.broadcast %4 : vector<1x128xf32> to vector<256x128xf32>
    %6 = arith.addf %3, %5 : vector<256x128xf32>
    %cst_6 = arith.constant 0.000000e+00 : f32
    %7 = vector.broadcast %cst_6 : f32 to vector<256x128xf32>
    %8 = arith.maximumf %6, %7 : vector<256x128xf32>
    %9 = arith.truncf %8 : vector<256x128xf32> to vector<256x128xbf16>
    %c0_7 = arith.constant 0 : index
    %c0_8 = arith.constant 0 : index
    %10 = vector.load %arg6[%c0_7, %c0_8] : memref<128x64xbf16, #tpu.memory_space<vmem>>, vector<128x64xbf16>
    %cst_9 = arith.constant dense<0.000000e+00> : vector<256x64xf32>
    %11 = tpu.matmul %9, %10, %cst_9 {dimension_numbers = #tpu.dot_dimension_numbers<[1], [0], [0], [1], [0, 0, 1, 1], [], []>} : vector<256x128xbf16>, vector<128x64xbf16>, vector<256x64xf32> -> vector<256x64xf32>
    %c0_10 = arith.constant 0 : index
    %c0_11 = arith.constant 0 : index
    %c0_12 = arith.constant 0 : index
    %12 = vector.load %arg3[%c0_10, %c0_11, %c0_12] : memref<1x1x64xf32, #tpu.memory_space<vmem>>, vector<1x1x64xf32>
    %13 = vector.shape_cast %12 : vector<1x1x64xf32> to vector<1x64xf32>
    %14 = vector.broadcast %13 : vector<1x64xf32> to vector<256x64xf32>
    %15 = arith.addf %11, %14 : vector<256x64xf32>
    %16 = arith.negf %15 : vector<256x64xf32>
    %17 = math.exp %16 : vector<256x64xf32>
    %cst_13 = arith.constant 1.000000e+00 : f32
    %18 = vector.broadcast %cst_13 : f32 to vector<256x64xf32>
    %19 = arith.addf %18, %17 : vector<256x64xf32>
    %20 = arith.divf %18, %19 : vector<256x64xf32>
    %21 = arith.extf %1 : vector<256x64xbf16> to vector<256x64xf32>
    %22 = arith.mulf %21, %20 : vector<256x64xf32>
    %23 = arith.truncf %22 : vector<256x64xf32> to vector<256x64xbf16>
    %c0_14 = arith.constant 0 : index
    %c0_15 = arith.constant 0 : index
    %c0_16 = arith.constant 0 : index
    %24 = vector.load %arg7[%c0_14, %c0_15, %c0_16] : memref<1x256x64xbf16, #tpu.memory_space<vmem>>, vector<1x256x64xbf16>
    %25 = vector.shape_cast %24 : vector<1x256x64xbf16> to vector<256x64xbf16>
    %26 = vector.shape_cast %23 : vector<256x64xbf16> to vector<1x256x64xbf16>
    tpu.vector_store %arg7[%c0_14, %c0_15, %c0_16], %26 {strides = array<i32>} : memref<1x256x64xbf16, #tpu.memory_space<vmem>>, vector<1x256x64xbf16>,
    return
  }
  func.func @transform_0(%arg0: i32, %arg1: i32) -> (i32, i32, i32) {
    %c0_i32 = arith.constant 0 : i32
    %c0_i32_0 = arith.constant 0 : i32
    return %arg0, %arg1, %c0_i32 : i32, i32, i32
  }
  func.func @transform_1(%arg0: i32, %arg1: i32) -> (i32, i32, i32) {
    %c0_i32 = arith.constant 0 : i32
    %c0_i32_0 = arith.constant 0 : i32
    %c0_i32_1 = arith.constant 0 : i32
    return %arg0, %c0_i32, %c0_i32_0 : i32, i32, i32
  }
  func.func @transform_2(%arg0: i32, %arg1: i32) -> (i32, i32) {
    %c0_i32 = arith.constant 0 : i32
    %c0_i32_0 = arith.constant 0 : i32
    %c0_i32_1 = arith.constant 0 : i32
    return %c0_i32, %c0_i32_0 : i32, i32
  }
  func.func @transform_3(%arg0: i32, %arg1: i32) -> (i32, i32) {
    %c0_i32 = arith.constant 0 : i32
    %c0_i32_0 = arith.constant 0 : i32
    %c0_i32_1 = arith.constant 0 : i32
    return %c0_i32, %c0_i32_0 : i32, i32
  }
  func.func @transform_4(%arg0: i32, %arg1: i32) -> (i32, i32) {
    %c0_i32 = arith.constant 0 : i32
    %c0_i32_0 = arith.constant 0 : i32
    %c0_i32_1 = arith.constant 0 : i32
    return %c0_i32, %c0_i32_0 : i32, i32
  }
  func.func @transform_5(%arg0: i32, %arg1: i32) -> (i32, i32, i32) {
    %c0_i32 = arith.constant 0 : i32
    %c0_i32_0 = arith.constant 0 : i32
    return %arg0, %arg1, %c0_i32 : i32, i32, i32
  }
}

</mosaic_0001>

<llo_original>
// kernel: ms_cam_forward.1
$region0: #{ms_cam_forward.1}
  #allocation0 [shape = 'u32[]', space=smem, size = 0x4, offset = 0x4, fixed_abs, tag = 'smem constant byte address 0x4 - core index']
  #allocation1 [shape = 'u32[72,128]{1,0:T(1,128)}', space=vmem, size = 0x9000, scoped, tag = 'internal scratch']
  %s0 = inlined_call_operand.vmem [shape: bf16[2,256,64], index: 0, kind: input, shape index: {}]
  %s1 = inlined_call_operand.vmem [shape: f32[2,1,64], index: 1, kind: input, shape index: {}]
  %s2 = inlined_call_operand.vmem [shape: bf16[64,128], index: 2, kind: input, shape index: {}]
  %s3 = inlined_call_operand.vmem [shape: f32[1,128], index: 3, kind: input, shape index: {}]
  %s4 = inlined_call_operand.vmem [shape: bf16[128,64], index: 4, kind: input, shape index: {}]
  %s5 = inlined_call_operand.hbm [shape: bf16[2,256,64], index: 5, kind: output, shape index: {}]
  %s6 = sld [smem:[#allocation0]]
  $region53: #{ms_cam_forward.1} parent=0
    _
  %s8 = ssub.s32 1, %s6
  %s9 = scalar_select 0, %s8, %s6
  $region1: #{ms_cam_forward.1} parent=0
    #allocation2 [shape = 'u8[131072]{0}', space=vmem, size = 0x20000, scoped, tag = 'output window, operand 0']
    #allocation3 [shape = 's32[2]{0}', space=sflag, size = 0x8, scoped, tag = 'scoped memory for ms_cam_forward.1']
    %10 = vsyncpa [#allocation3], 0
    %s11 = scalar_lea.sflag [#allocation3], 1
    %12 = vsyncpa %s11, 0
    loop: start=0, step=1, limit=4
    $region2: #{ms_cam_forward.1} parent=1 // loop_pre_header
      _
    $region3: #{ms_cam_forward.1} parent=1 // loop_header
      %s14 = sphi 0, %s18
      %p15 = scmp.ge.s32.totalorder %s14, 4
      %s21 = sphi 0, %s33
      %s22 = sphi 0, %s29
      %s23 = sphi 0, %s21
      %s24 = sphi 0, %s22
      %s25 = sphi 0, %s23
      %s26 = sphi 0, %s24
      %s38 = sphi 0, %s40
      %s41 = sphi 0, %s38
      %s42 = sphi 0, %s41
      %s58 = sphi 0, %s42
      %s64 = sphi 0, %s66
      %s67 = sphi 0, %s64
      %s68 = sphi 0, %s67
      %s84 = sphi 0, %s68
      %s88 = sphi 0, %s88
      %s90 = sphi 0, %s88
      %s91 = sphi 0, %s90
      %s105 = sphi 0, %s91
      %s109 = sphi 0, %s109
      %s111 = sphi 0, %s109
      %s112 = sphi 0, %s111
      %s126 = sphi 0, %s112
      %s130 = sphi 0, %s130
      %s132 = sphi 0, %s130
      %s133 = sphi 0, %s132
      %s147 = sphi 0, %s133
      %s155 = sphi 0, %s157
      %s158 = sphi 0, %s155
      %s159 = sphi 0, %s158
      %s175 = sphi 0, %s159
    $region4: #{ms_cam_forward.1} parent=1 // loop_header_branch
      %17 = sbr.rel (%p15) target = $region8
    $region5: #{ms_cam_forward.1} parent=1 // loop_body
      %s19 = ssub.s32 %s14, 1
      %s20 = ssub.s32 %s14, 2
      %s27 = sadd.s32 1, %s22
      %p28 = scmp.ge.s32.totalorder %s27, 1
      %s29 = scalar_select %p28, 0, %s27
      %s30 = sadd.s32 1, %s21
      %s31 = scalar_select %p28, %s30, %s21
      %p32 = scmp.ge.s32.totalorder %s31, 2
      %s33 = scalar_select %p32, 0, %s31
      %s34 = ssub.s32 %s21, %s33
      %s35 = ssub.s32 %s22, %s29
      %s36 = sor.u32 %s34, %s35
      %p37 = scmp.eq.s32.totalorder %s36, 0
      %s39 = sadd.s32 %s38, 1
      %s40 = scalar_select %p37, %s38, %s39
      %p43 = pneg %p37
      %p44 = scmp.eq.s32.totalorder %s14, 1
      %p45 = por %p43, %p44
      %p46 = scmp.ne.s32.totalorder %s38, %s41
      %p47 = scmp.eq.s32.totalorder %s14, 0
      %p48 = por %p46, %p47
      %p49 = scmp.ne.s32.totalorder %s38, %s41
      %p50 = scmp.eq.s32.totalorder %s19, 1
      %p51 = por %p49, %p50
      %p52 = scmp.ne.s32.totalorder %s41, %s42
      %p53 = scmp.eq.s32.totalorder %s19, 0
      %p54 = por %p52, %p53
      %p55 = scmp.ne.s32.totalorder %s41, %s42
      %p56 = scmp.eq.s32.totalorder %s20, 1
      %p57 = por %p55, %p56
      %p59 = scmp.ne.s32.totalorder %s42, %s58
      %p60 = scmp.eq.s32.totalorder %s20, 0
      %p61 = por %p59, %p60
      %s62 = ssub.s32 %s21, %s33
      %p63 = scmp.eq.s32.totalorder %s62, 0
      %s65 = sadd.s32 %s64, 1
      %s66 = scalar_select %p63, %s64, %s65
      %p69 = pneg %p63
      %p70 = scmp.eq.s32.totalorder %s14, 1
      %p71 = por %p69, %p70
      %p72 = scmp.ne.s32.totalorder %s64, %s67
      %p73 = scmp.eq.s32.totalorder %s14, 0
      %p74 = por %p72, %p73
      %p75 = scmp.ne.s32.totalorder %s64, %s67
      %p76 = scmp.eq.s32.totalorder %s19, 1
      %p77 = por %p75, %p76
      %p78 = scmp.ne.s32.totalorder %s67, %s68
      %p79 = scmp.eq.s32.totalorder %s19, 0
      %p80 = por %p78, %p79
      %p81 = scmp.ne.s32.totalorder %s67, %s68
      %p82 = scmp.eq.s32.totalorder %s20, 1
      %p83 = por %p81, %p82
      %p85 = scmp.ne.s32.totalorder %s68, %s84
      %p86 = scmp.eq.s32.totalorder %s20, 0
      %p87 = por %p85, %p86
      %s89 = sadd.s32 %s88, 1
      %p92 = scmp.eq.s32.totalorder %s14, 1
      %p93 = scmp.ne.s32.totalorder %s88, %s90
      %p94 = scmp.eq.s32.totalorder %s14, 0
      %p95 = por %p93, %p94
      %p96 = scmp.ne.s32.totalorder %s88, %s90
      %p97 = scmp.eq.s32.totalorder %s19, 1
      %p98 = por %p96, %p97
      %p99 = scmp.ne.s32.totalorder %s90, %s91
      %p100 = scmp.eq.s32.totalorder %s19, 0
      %p101 = por %p99, %p100
      %p102 = scmp.ne.s32.totalorder %s90, %s91
      %p103 = scmp.eq.s32.totalorder %s20, 1
      %p104 = por %p102, %p103
      %p106 = scmp.ne.s32.totalorder %s91, %s105
      %p107 = scmp.eq.s32.totalorder %s20, 0
      %p108 = por %p106, %p107
      %s110 = sadd.s32 %s109, 1
      %p113 = scmp.eq.s32.totalorder %s14, 1
      %p114 = scmp.ne.s32.totalorder %s109, %s111
      %p115 = scmp.eq.s32.totalorder %s14, 0
      %p116 = por %p114, %p115
      %p117 = scmp.ne.s32.totalorder %s109, %s111
      %p118 = scmp.eq.s32.totalorder %s19, 1
      %p119 = por %p117, %p118
      %p120 = scmp.ne.s32.totalorder %s111, %s112
      %p121 = scmp.eq.s32.totalorder %s19, 0
      %p122 = por %p120, %p121
      %p123 = scmp.ne.s32.totalorder %s111, %s112
      %p124 = scmp.eq.s32.totalorder %s20, 1
      %p125 = por %p123, %p124
      %p127 = scmp.ne.s32.totalorder %s112, %s126
      %p128 = scmp.eq.s32.totalorder %s20, 0
      %p129 = por %p127, %p128
      %s131 = sadd.s32 %s130, 1
      %p134 = scmp.eq.s32.totalorder %s14, 1
      %p135 = scmp.ne.s32.totalorder %s130, %s132
      %p136 = scmp.eq.s32.totalorder %s14, 0
      %p137 = por %p135, %p136
      %p138 = scmp.ne.s32.totalorder %s130, %s132
      %p139 = scmp.eq.s32.totalorder %s19, 1
      %p140 = por %p138, %p139
      %p141 = scmp.ne.s32.totalorder %s132, %s133
      %p142 = scmp.eq.s32.totalorder %s19, 0
      %p143 = por %p141, %p142
      %p144 = scmp.ne.s32.totalorder %s132, %s133
      %p145 = scmp.eq.s32.totalorder %s20, 1
      %p146 = por %p144, %p145
      %p148 = scmp.ne.s32.totalorder %s133, %s147
      %p149 = scmp.eq.s32.totalorder %s20, 0
      %p150 = por %p148, %p149
      %s151 = ssub.s32 %s21, %s33
      %s152 = ssub.s32 %s22, %s29
      %s153 = sor.u32 %s151, %s152
      %p154 = scmp.eq.s32.totalorder %s153, 0
      %s156 = sadd.s32 %s155, 1
      %s157 = scalar_select %p154, %s155, %s156
      %p160 = pneg %p154
      %p161 = scmp.eq.s32.totalorder %s14, 1
      %p162 = por %p160, %p161
      %p163 = scmp.ne.s32.totalorder %s155, %s158
      %p164 = scmp.eq.s32.totalorder %s14, 0
      %p165 = por %p163, %p164
      %p166 = scmp.ne.s32.totalorder %s155, %s158
      %p167 = scmp.eq.s32.totalorder %s19, 1
      %p168 = por %p166, %p167
      %p169 = scmp.ne.s32.totalorder %s158, %s159
      %p170 = scmp.eq.s32.totalorder %s19, 0
      %p171 = por %p169, %p170
      %p172 = scmp.ne.s32.totalorder %s158, %s159
      %p173 = scmp.eq.s32.totalorder %s20, 1
      %p174 = por %p172, %p173
      %p176 = scmp.ne.s32.totalorder %s159, %s175
      %p177 = scmp.eq.s32.totalorder %s20, 0
      %p178 = por %p176, %p177
      %p179 = scmp.le.s32.totalorder 1, %s14
      %p180 = scmp.lt.s32.totalorder %s14, 3
      %p181 = pnand %p179, %p180
      %p182 = pneg %p181
      // Predicated region
      $region9: #{ms_cam_forward.1} parent=5 // pred_check
        _
      $region10: #{ms_cam_forward.1} parent=5 // pred_check_branch
        %184 = sbr.rel (%p181) target = $region12
      $region11: #{ms_cam_forward.1} parent=5 // pred_region
        %s185 = ssub.s32 %s14, 1
        // Predicated region
        $region13: #{ms_cam_forward.1} parent=11 // pred_check
          %p186 = pneg %p101
        $region14: #{ms_cam_forward.1} parent=11 // pred_check_branch
          %188 = sbr.rel (%p186) target = $region16
        $region15: #{ms_cam_forward.1} parent=11 // pred_region
          _
        $region16: #{ms_cam_forward.1} parent=11 // pred_fallthru
          _
        // Predicated region
        $region17: #{ms_cam_forward.1} parent=11 // pred_check
          %p189 = pneg %p122
        $region18: #{ms_cam_forward.1} parent=11 // pred_check_branch
          %191 = sbr.rel (%p189) target = $region20
        $region19: #{ms_cam_forward.1} parent=11 // pred_region
          _
        $region20: #{ms_cam_forward.1} parent=11 // pred_fallthru
          _
        // Predicated region
        $region21: #{ms_cam_forward.1} parent=11 // pred_check
          %p192 = pneg %p143
        $region22: #{ms_cam_forward.1} parent=11 // pred_check_branch
          %194 = sbr.rel (%p192) target = $region24
        $region23: #{ms_cam_forward.1} parent=11 // pred_region
          _
        $region24: #{ms_cam_forward.1} parent=11 // pred_fallthru
          _
      $region12: #{ms_cam_forward.1} parent=5 // pred_fallthru
        _
      %p195 = scmp.lt.s32.totalorder %s14, 2
      // Predicated region
      $region25: #{ms_cam_forward.1} parent=5 // pred_check
        %p196 = pneg %p195
      $region26: #{ms_cam_forward.1} parent=5 // pred_check_branch
        %198 = sbr.rel (%p196) target = $region28
      $region27: #{ms_cam_forward.1} parent=5 // pred_region
        // Predicated region
        $region29: #{ms_cam_forward.1} parent=27 // pred_check
          %p199 = pneg %p48
        $region30: #{ms_cam_forward.1} parent=27 // pred_check_branch
          %201 = sbr.rel (%p199) target = $region32
        $region31: #{ms_cam_forward.1} parent=27 // pred_region
          %s202 = smul.u32 32, %s22
          %p203 = scmp.lt.s32.totalorder %s21, 1
          %s204 = scalar_select %p203, %s21, 1
          %p205 = scmp.lt.s32.totalorder %s202, 31
          %s206 = scalar_select %p205, %s202, 31
          %s207 = smul.addr %s204, 32
          %s208 = sadd.s32 %s206, %s207
          %s209 = smul.addr %s208, 4
          %s210 = scalar_lea.vmem %s0, %s209
          %s211 = smul.u32 32, %s22
        $region32: #{ms_cam_forward.1} parent=27 // pred_fallthru
          _
        // Predicated region
        $region33: #{ms_cam_forward.1} parent=27 // pred_check
          %p212 = pneg %p74
        $region34: #{ms_cam_forward.1} parent=27 // pred_check_branch
          %214 = sbr.rel (%p212) target = $region36
        $region35: #{ms_cam_forward.1} parent=27 // pred_region
          %p215 = scmp.lt.s32.totalorder %s21, 1
          %s216 = scalar_select %p215, %s21, 1
          %s217 = scalar_lea.vmem %s1, %s216
        $region36: #{ms_cam_forward.1} parent=27 // pred_fallthru
          _
      $region28: #{ms_cam_forward.1} parent=5 // pred_fallthru
        _
      %p218 = scmp.le.s32.totalorder 1, %s14
      %p219 = scmp.lt.s32.totalorder %s14, 3
      %p220 = pnand %p218, %p219
      %p221 = pneg %p220
      // Predicated region
      $region37: #{ms_cam_forward.1} parent=5 // pred_check
        _
      $region38: #{ms_cam_forward.1} parent=5 // pred_check_branch
        %223 = sbr.rel (%p220) target = $region40
      $region39: #{ms_cam_forward.1} parent=5 // pred_region
        %s224 = ssub.s32 %s14, 1
        %s225 = smul.u32 32, %s24
        %p226 = scmp.lt.s32.totalorder %s23, 1
        %s227 = scalar_select %p226, %s23, 1
        %p228 = scmp.lt.s32.totalorder %s225, 31
        %s229 = scalar_select %p228, %s225, 31
        %s230 = smul.addr %s227, 32
        %s231 = sadd.s32 %s229, %s230
        %s232 = smul.addr %s231, 4
        %s233 = scalar_lea.vmem %s0, %s232
        %p234 = pneg %p54
        %p235 = pneg %p51
        %p236 = scmp.lt.s32.totalorder %s23, 1
        %s237 = scalar_select %p236, %s23, 1
        %s238 = scalar_lea.vmem %s1, %s237
        %p239 = pneg %p80
        %p240 = pneg %p77
        %p241 = pneg %p101
        %p242 = pneg %p98
        %p243 = pneg %p122
        %p244 = pneg %p119
        %p245 = pneg %p143
        %p246 = pneg %p140
        %p247 = pneg %p171
        %p248 = pneg %p168
        %s249 = sand.u32 %s158, 1
        %s250 = scalar_lea.sflag [#allocation3], %s249
        %s251 = sand.u32 %s158, 1
        %s252 = smul.addr %s251, 128
        %s253 = scalar_lea.vmem [#allocation2], %s252
        %s254 = smul.u32 32, %s24
        %p255 = scmp.lt.s32.totalorder %s23, 1
        %s256 = scalar_select %p255, %s23, 1
        %p257 = scmp.lt.s32.totalorder %s254, 31
        %s258 = scalar_select %p257, %s254, 31
        %s259 = smul.addr %s256, 32
        %s260 = sadd.s32 %s258, %s259
        %s261 = smul.addr %s260, 4
        %s262 = scalar_lea.vmem %s0, %s261
        %s263 = smul.u32 32, %s24
        %p264 = scmp.lt.s32.totalorder %s23, 1
        %s265 = scalar_select %p264, %s23, 1
        %s266 = scalar_lea.vmem %s1, %s265
        %s267 = smul.u32 32, %s24
        %v269 = vld [vmem:[%s262] sm:$0xf]
        %v270 = vld [vmem:[%s262 + $0x4] sm:$0xf]
        %v271 = vld [vmem:[%s262 + $0x8] sm:$0xf]
        %v272 = vld [vmem:[%s262 + $0xc] sm:$0xf]
        %v273 = vld [vmem:[%s262 + $0x10] sm:$0xf]
        %v274 = vld [vmem:[%s262 + $0x14] sm:$0xf]
        %v275 = vld [vmem:[%s262 + $0x18] sm:$0xf]
        %v276 = vld [vmem:[%s262 + $0x1c] sm:$0xf]
        %v277 = vld [vmem:[%s262 + $0x20] sm:$0xf]
        %v278 = vld [vmem:[%s262 + $0x24] sm:$0xf]
        %v279 = vld [vmem:[%s262 + $0x28] sm:$0xf]
        %v280 = vld [vmem:[%s262 + $0x2c] sm:$0xf]
        %v281 = vld [vmem:[%s262 + $0x30] sm:$0xf]
        %v282 = vld [vmem:[%s262 + $0x34] sm:$0xf]
        %v283 = vld [vmem:[%s262 + $0x38] sm:$0xf]
        %v284 = vld [vmem:[%s262 + $0x3c] sm:$0xf]
        %v285 = vld [vmem:[%s262 + $0x40] sm:$0xf]
        %v286 = vld [vmem:[%s262 + $0x44] sm:$0xf]
        %v287 = vld [vmem:[%s262 + $0x48] sm:$0xf]
        %v288 = vld [vmem:[%s262 + $0x4c] sm:$0xf]
        %v289 = vld [vmem:[%s262 + $0x50] sm:$0xf]
        %v290 = vld [vmem:[%s262 + $0x54] sm:$0xf]
        %v291 = vld [vmem:[%s262 + $0x58] sm:$0xf]
        %v292 = vld [vmem:[%s262 + $0x5c] sm:$0xf]
        %v293 = vld [vmem:[%s262 + $0x60] sm:$0xf]
        %v294 = vld [vmem:[%s262 + $0x64] sm:$0xf]
        %v295 = vld [vmem:[%s262 + $0x68] sm:$0xf]
        %v296 = vld [vmem:[%s262 + $0x6c] sm:$0xf]
        %v297 = vld [vmem:[%s262 + $0x70] sm:$0xf]
        %v298 = vld [vmem:[%s262 + $0x74] sm:$0xf]
        %v299 = vld [vmem:[%s262 + $0x78] sm:$0xf]
        %v300 = vld [vmem:[%s262 + $0x7c] sm:$0xf]
        %v301 = vld [vmem:[%s2] sm:$0xf]
        %v302 = vld [vmem:[%s2 + $0x4] sm:$0xf]
        %v303 = vld [vmem:[%s2 + $0x8] sm:$0xf]
        %v304 = vld [vmem:[%s2 + $0xc] sm:$0xf]
        %v305 = vld [vmem:[%s2 + $0x10] sm:$0xf]
        %v306 = vld [vmem:[%s2 + $0x14] sm:$0xf]
        %v307 = vld [vmem:[%s2 + $0x18] sm:$0xf]
        %v308 = vld [vmem:[%s2 + $0x1c] sm:$0xf]
        %v309 = vld [vmem:[%s3] sm:$0x1]
        %v311 = vperm.slane %v309, 0
        %v345 = vunpack.c.l.b16 %v269
        %v346 = vunpack.c.l.b16 %v270
        %v347 = vunpack.c.l.b16 %v271
        %v348 = vunpack.c.l.b16 %v272
        %v349 = vunpack.c.l.b16 %v273
        %v350 = vunpack.c.l.b16 %v274
        %v351 = vunpack.c.l.b16 %v275
        %v352 = vunpack.c.l.b16 %v276
        %v353 = vunpack.c.l.b16 %v277
        %v354 = vunpack.c.l.b16 %v278
        %v355 = vunpack.c.l.b16 %v279
        %v356 = vunpack.c.l.b16 %v280
        %v357 = vunpack.c.l.b16 %v281
        %v358 = vunpack.c.l.b16 %v282
        %v359 = vunpack.c.l.b16 %v283
        %v360 = vunpack.c.l.b16 %v284
        %v361 = vunpack.c.l.b16 %v285
        %v362 = vunpack.c.l.b16 %v286
        %v363 = vunpack.c.l.b16 %v287
        %v364 = vunpack.c.l.b16 %v288
        %v365 = vunpack.c.l.b16 %v289
        %v366 = vunpack.c.l.b16 %v290
        %v367 = vunpack.c.l.b16 %v291
        %v368 = vunpack.c.l.b16 %v292
        %v369 = vunpack.c.l.b16 %v293
        %v370 = vunpack.c.l.b16 %v294
        %v371 = vunpack.c.l.b16 %v295
        %v372 = vunpack.c.l.b16 %v296
        %v373 = vunpack.c.l.b16 %v297
        %v374 = vunpack.c.l.b16 %v298
        %v375 = vunpack.c.l.b16 %v299
        %v376 = vunpack.c.l.b16 %v300
        %v377 = vpack.c.b16 %v346, %v345
        %v378 = vpack.c.b16 %v348, %v347
        %v379 = vpack.c.b16 %v350, %v349
        %v380 = vpack.c.b16 %v352, %v351
        %v381 = vpack.c.b16 %v354, %v353
        %v382 = vpack.c.b16 %v356, %v355
        %v383 = vpack.c.b16 %v358, %v357
        %v384 = vpack.c.b16 %v360, %v359
        %v385 = vpack.c.b16 %v362, %v361
        %v386 = vpack.c.b16 %v364, %v363
        %v387 = vpack.c.b16 %v366, %v365
        %v388 = vpack.c.b16 %v368, %v367
        %v389 = vpack.c.b16 %v370, %v369
        %v390 = vpack.c.b16 %v372, %v371
        %v391 = vpack.c.b16 %v374, %v373
        %v392 = vpack.c.b16 %v376, %v375
        %v401 = vunpack.c.l.b16 %v301
        %v402 = vunpack.c.l.b16 %v302
        %v403 = vunpack.c.l.b16 %v303
        %v404 = vunpack.c.l.b16 %v304
        %v405 = vunpack.c.l.b16 %v305
        %v406 = vunpack.c.l.b16 %v306
        %v407 = vunpack.c.l.b16 %v307
        %v408 = vunpack.c.l.b16 %v308
        %v409 = vpack.c.b16 %v402, %v401
        %v410 = vpack.c.b16 %v404, %v403
        %v411 = vpack.c.b16 %v406, %v405
        %v412 = vpack.c.b16 %v408, %v407
        %vm417 = vcmask 523264
        %v419 = vsel %vm417, %v377, 0
        %v422 = vsel %vm417, %v378, 0
        %v425 = vsel %vm417, %v379, 0
        %v428 = vsel %vm417, %v380, 0
        %v431 = vsel %vm417, %v381, 0
        %v434 = vsel %vm417, %v382, 0
        %v437 = vsel %vm417, %v383, 0
        %v440 = vsel %vm417, %v384, 0
        %v443 = vsel %vm417, %v385, 0
        %v446 = vsel %vm417, %v386, 0
        %v449 = vsel %vm417, %v387, 0
        %v452 = vsel %vm417, %v388, 0
        %v455 = vsel %vm417, %v389, 0
        %v458 = vsel %vm417, %v390, 0
        %v461 = vsel %vm417, %v391, 0
        %v464 = vsel %vm417, %v392, 0
        %466 = vmatpush.bf16.msra.mxu0 0
        %467 = vmatpush.bf16.msra.mxu0 0
        %468 = vmatpush.bf16.msra.mxu0 0
        %469 = vmatpush.bf16.msra.mxu0 0
        %470 = vmatpush.bf16.msra.mxu0 %v412
        %471 = vmatpush.bf16.msra.mxu0 %v411
        %472 = vmatpush.bf16.msra.mxu0 %v410
        %473 = vmatpush.bf16.msra.mxu0 %v409
        %474 = vmatmul.bf16.gmra.mxu0 %v419
        %v475 = vpop.f32.mrf.mxu0
        %v476 = vadd.f32 %v311, %v475
        %v477 = vpop.f32.mrf.mxu0
        %v478 = vadd.f32 %v311, %v477
        %479 = vmatmul.bf16.gmra.mxu0 %v422
        %v480 = vpop.f32.mrf.mxu0
        %v481 = vadd.f32 %v311, %v480
        %v482 = vpop.f32.mrf.mxu0
        %v483 = vadd.f32 %v311, %v482
        %484 = vmatmul.bf16.gmra.mxu0 %v425
        %v485 = vpop.f32.mrf.mxu0
        %v486 = vadd.f32 %v311, %v485
        %v487 = vpop.f32.mrf.mxu0
        %v488 = vadd.f32 %v311, %v487
        %489 = vmatmul.bf16.gmra.mxu0 %v428
        %v490 = vpop.f32.mrf.mxu0
        %v491 = vadd.f32 %v311, %v490
        %v492 = vpop.f32.mrf.mxu0
        %v493 = vadd.f32 %v311, %v492
        %494 = vmatmul.bf16.gmra.mxu0 %v431
        %v495 = vpop.f32.mrf.mxu0
        %v496 = vadd.f32 %v311, %v495
        %v497 = vpop.f32.mrf.mxu0
        %v498 = vadd.f32 %v311, %v497
        %499 = vmatmul.bf16.gmra.mxu0 %v434
        %v500 = vpop.f32.mrf.mxu0
        %v501 = vadd.f32 %v311, %v500
        %v502 = vpop.f32.mrf.mxu0
        %v503 = vadd.f32 %v311, %v502
        %504 = vmatmul.bf16.gmra.mxu0 %v437
        %v505 = vpop.f32.mrf.mxu0
        %v506 = vadd.f32 %v311, %v505
        %v507 = vpop.f32.mrf.mxu0
        %v508 = vadd.f32 %v311, %v507
        %509 = vmatmul.bf16.gmra.mxu0 %v440
        %v510 = vpop.f32.mrf.mxu0
        %v511 = vadd.f32 %v311, %v510
        %v512 = vpop.f32.mrf.mxu0
        %v513 = vadd.f32 %v311, %v512
        %514 = vmatmul.bf16.gmra.mxu0 %v443
        %v515 = vpop.f32.mrf.mxu0
        %v516 = vadd.f32 %v311, %v515
        %v517 = vpop.f32.mrf.mxu0
        %v518 = vadd.f32 %v311, %v517
        %519 = vmatmul.bf16.gmra.mxu0 %v446
        %v520 = vpop.f32.mrf.mxu0
        %v521 = vadd.f32 %v311, %v520
        %v522 = vpop.f32.mrf.mxu0
        %v523 = vadd.f32 %v311, %v522
        %524 = vmatmul.bf16.gmra.mxu0 %v449
        %v525 = vpop.f32.mrf.mxu0
        %v526 = vadd.f32 %v311, %v525
        %v527 = vpop.f32.mrf.mxu0
        %v528 = vadd.f32 %v311, %v527
        %529 = vmatmul.bf16.gmra.mxu0 %v452
        %v530 = vpop.f32.mrf.mxu0
        %v531 = vadd.f32 %v311, %v530
        %v532 = vpop.f32.mrf.mxu0
        %v533 = vadd.f32 %v311, %v532
        %534 = vmatmul.bf16.gmra.mxu0 %v455
        %v535 = vpop.f32.mrf.mxu0
        %v536 = vadd.f32 %v311, %v535
        %v537 = vpop.f32.mrf.mxu0
        %v538 = vadd.f32 %v311, %v537
        %539 = vmatmul.bf16.gmra.mxu0 %v458
        %v540 = vpop.f32.mrf.mxu0
        %v541 = vadd.f32 %v311, %v540
        %v542 = vpop.f32.mrf.mxu0
        %v543 = vadd.f32 %v311, %v542
        %544 = vmatmul.bf16.gmra.mxu0 %v461
        %v545 = vpop.f32.mrf.mxu0
        %v546 = vadd.f32 %v311, %v545
        %v547 = vpop.f32.mrf.mxu0
        %v548 = vadd.f32 %v311, %v547
        %549 = vmatmul.bf16.gmra.mxu0 %v464
        %v550 = vpop.f32.mrf.mxu0
        %v551 = vadd.f32 %v311, %v550
        %v552 = vpop.f32.mrf.mxu0
        %v553 = vadd.f32 %v311, %v552
        %554 = vdwg.mxu0
        %v555 = vmax.f32 %v476, 0.0
        %v556 = vmax.f32 %v478, 0.0
        %v557 = vmax.f32 %v481, 0.0
        %v558 = vmax.f32 %v483, 0.0
        %v559 = vmax.f32 %v486, 0.0
        %v560 = vmax.f32 %v488, 0.0
        %v561 = vmax.f32 %v491, 0.0
        %v562 = vmax.f32 %v493, 0.0
        %v563 = vmax.f32 %v496, 0.0
        %v564 = vmax.f32 %v498, 0.0
        %v565 = vmax.f32 %v501, 0.0
        %v566 = vmax.f32 %v503, 0.0
        %v567 = vmax.f32 %v506, 0.0
        %v568 = vmax.f32 %v508, 0.0
        %v569 = vmax.f32 %v511, 0.0
        %v570 = vmax.f32 %v513, 0.0
        %v571 = vmax.f32 %v516, 0.0
        %v572 = vmax.f32 %v518, 0.0
        %v573 = vmax.f32 %v521, 0.0
        %v574 = vmax.f32 %v523, 0.0
        %v575 = vmax.f32 %v526, 0.0
        %v576 = vmax.f32 %v528, 0.0
        %v577 = vmax.f32 %v531, 0.0
        %v578 = vmax.f32 %v533, 0.0
        %v579 = vmax.f32 %v536, 0.0
        %v580 = vmax.f32 %v538, 0.0
        %v581 = vmax.f32 %v541, 0.0
        %v582 = vmax.f32 %v543, 0.0
        %v583 = vmax.f32 %v546, 0.0
        %v584 = vmax.f32 %v548, 0.0
        %v585 = vmax.f32 %v551, 0.0
        %v586 = vmax.f32 %v553, 0.0
        %v587 = vpack.c.bf16 %v556, %v555
        %v588 = vpack.c.bf16 %v558, %v557
        %v589 = vpack.c.bf16 %v560, %v559
        %v590 = vpack.c.bf16 %v562, %v561
        %v591 = vpack.c.bf16 %v564, %v563
        %v592 = vpack.c.bf16 %v566, %v565
        %v593 = vpack.c.bf16 %v568, %v567
        %v594 = vpack.c.bf16 %v570, %v569
        %v595 = vpack.c.bf16 %v572, %v571
        %v596 = vpack.c.bf16 %v574, %v573
        %v597 = vpack.c.bf16 %v576, %v575
        %v598 = vpack.c.bf16 %v578, %v577
        %v599 = vpack.c.bf16 %v580, %v579
        %v600 = vpack.c.bf16 %v582, %v581
        %v601 = vpack.c.bf16 %v584, %v583
        %v602 = vpack.c.bf16 %v586, %v585
        %v603 = vld [vmem:[%s4] sm:$0xf]
        %v604 = vld [vmem:[%s4 + $0x4] sm:$0xf]
        %v605 = vld [vmem:[%s4 + $0x8] sm:$0xf]
        %v606 = vld [vmem:[%s4 + $0xc] sm:$0xf]
        %v607 = vld [vmem:[%s4 + $0x10] sm:$0xf]
        %v608 = vld [vmem:[%s4 + $0x14] sm:$0xf]
        %v609 = vld [vmem:[%s4 + $0x18] sm:$0xf]
        %v610 = vld [vmem:[%s4 + $0x1c] sm:$0xf]
        %v611 = vld [vmem:[%s4 + $0x20] sm:$0xf]
        %v612 = vld [vmem:[%s4 + $0x24] sm:$0xf]
        %v613 = vld [vmem:[%s4 + $0x28] sm:$0xf]
        %v614 = vld [vmem:[%s4 + $0x2c] sm:$0xf]
        %v615 = vld [vmem:[%s4 + $0x30] sm:$0xf]
        %v616 = vld [vmem:[%s4 + $0x34] sm:$0xf]
        %v617 = vld [vmem:[%s4 + $0x38] sm:$0xf]
        %v618 = vld [vmem:[%s4 + $0x3c] sm:$0xf]
        %v619 = vld [vmem:[%s266] sm:$0x1]
        %v621 = vperm.slane %v619, 0
        %v639 = vunpack.c.l.b16 %v603
        %v640 = vunpack.c.l.b16 %v604
        %v641 = vunpack.c.l.b16 %v605
        %v642 = vunpack.c.l.b16 %v606
        %v643 = vunpack.c.l.b16 %v607
        %v644 = vunpack.c.l.b16 %v608
        %v645 = vunpack.c.l.b16 %v609
        %v646 = vunpack.c.l.b16 %v610
        %v647 = vunpack.c.l.b16 %v611
        %v648 = vunpack.c.l.b16 %v612
        %v649 = vunpack.c.l.b16 %v613
        %v650 = vunpack.c.l.b16 %v614
        %v651 = vunpack.c.l.b16 %v615
        %v652 = vunpack.c.l.b16 %v616
        %v653 = vunpack.c.l.b16 %v617
        %v654 = vunpack.c.l.b16 %v618
        %v655 = vpack.c.b16 %v640, %v639
        %v656 = vpack.c.b16 %v642, %v641
        %v657 = vpack.c.b16 %v644, %v643
        %v658 = vpack.c.b16 %v646, %v645
        %v659 = vpack.c.b16 %v648, %v647
        %v660 = vpack.c.b16 %v650, %v649
        %v661 = vpack.c.b16 %v652, %v651
        %v662 = vpack.c.b16 %v654, %v653
        %671 = vmatpush.bf16.msra.mxu0 %v662
        %672 = vmatpush.bf16.msra.mxu0 %v661
        %673 = vmatpush.bf16.msra.mxu0 %v660
        %674 = vmatpush.bf16.msra.mxu0 %v659
        %675 = vmatpush.bf16.msra.mxu0 %v658
        %676 = vmatpush.bf16.msra.mxu0 %v657
        %677 = vmatpush.bf16.msra.mxu0 %v656
        %678 = vmatpush.bf16.msra.mxu0 %v655
        %679 = vmatmul.bf16.gmra.mxu0 %v587
        %v680 = vpop.f32.mrf.mxu0
        %v681 = vadd.f32 %v621, %v680
        %v682 = vpop.f32.mrf.mxu0
        %v683 = vadd.f32 %v621, %v682
        %684 = vmatmul.bf16.gmra.mxu0 %v588
        %v685 = vpop.f32.mrf.mxu0
        %v686 = vadd.f32 %v621, %v685
        %v687 = vpop.f32.mrf.mxu0
        %v688 = vadd.f32 %v621, %v687
        %689 = vmatmul.bf16.gmra.mxu0 %v589
        %v690 = vpop.f32.mrf.mxu0
        %v691 = vadd.f32 %v621, %v690
        %v692 = vpop.f32.mrf.mxu0
        %v693 = vadd.f32 %v621, %v692
        %694 = vmatmul.bf16.gmra.mxu0 %v590
        %v695 = vpop.f32.mrf.mxu0
        %v696 = vadd.f32 %v621, %v695
        %v697 = vpop.f32.mrf.mxu0
        %v698 = vadd.f32 %v621, %v697
        %699 = vmatmul.bf16.gmra.mxu0 %v591
        %v700 = vpop.f32.mrf.mxu0
        %v701 = vadd.f32 %v621, %v700
        %v702 = vpop.f32.mrf.mxu0
        %v703 = vadd.f32 %v621, %v702
        %704 = vmatmul.bf16.gmra.mxu0 %v592
        %v705 = vpop.f32.mrf.mxu0
        %v706 = vadd.f32 %v621, %v705
        %v707 = vpop.f32.mrf.mxu0
        %v708 = vadd.f32 %v621, %v707
        %709 = vmatmul.bf16.gmra.mxu0 %v593
        %v710 = vpop.f32.mrf.mxu0
        %v711 = vadd.f32 %v621, %v710
        %v712 = vpop.f32.mrf.mxu0
        %v713 = vadd.f32 %v621, %v712
        %714 = vmatmul.bf16.gmra.mxu0 %v594
        %v715 = vpop.f32.mrf.mxu0
        %v716 = vadd.f32 %v621, %v715
        %v717 = vpop.f32.mrf.mxu0
        %v718 = vadd.f32 %v621, %v717
        %719 = vmatmul.bf16.gmra.mxu0 %v595
        %v720 = vpop.f32.mrf.mxu0
        %v721 = vadd.f32 %v621, %v720
        %v722 = vpop.f32.mrf.mxu0
        %v723 = vadd.f32 %v621, %v722
        %724 = vmatmul.bf16.gmra.mxu0 %v596
        %v725 = vpop.f32.mrf.mxu0
        %v726 = vadd.f32 %v621, %v725
        %v727 = vpop.f32.mrf.mxu0
        %v728 = vadd.f32 %v621, %v727
        %729 = vmatmul.bf16.gmra.mxu0 %v597
        %v730 = vpop.f32.mrf.mxu0
        %v731 = vadd.f32 %v621, %v730
        %v732 = vpop.f32.mrf.mxu0
        %v733 = vadd.f32 %v621, %v732
        %734 = vmatmul.bf16.gmra.mxu0 %v598
        %v735 = vpop.f32.mrf.mxu0
        %v736 = vadd.f32 %v621, %v735
        %v737 = vpop.f32.mrf.mxu0
        %v738 = vadd.f32 %v621, %v737
        %739 = vmatmul.bf16.gmra.mxu0 %v599
        %v740 = vpop.f32.mrf.mxu0
        %v741 = vadd.f32 %v621, %v740
        %v742 = vpop.f32.mrf.mxu0
        %v743 = vadd.f32 %v621, %v742
        %744 = vmatmul.bf16.gmra.mxu0 %v600
        %v745 = vpop.f32.mrf.mxu0
        %v746 = vadd.f32 %v621, %v745
        %v747 = vpop.f32.mrf.mxu0
        %v748 = vadd.f32 %v621, %v747
        %749 = vmatmul.bf16.gmra.mxu0 %v601
        %v750 = vpop.f32.mrf.mxu0
        %v751 = vadd.f32 %v621, %v750
        %v752 = vpop.f32.mrf.mxu0
        %v753 = vadd.f32 %v621, %v752
        %754 = vmatmul.bf16.gmra.mxu0 %v602
        %v755 = vpop.f32.mrf.mxu0
        %v756 = vadd.f32 %v621, %v755
        %v757 = vpop.f32.mrf.mxu0
        %v758 = vadd.f32 %v621, %v757
        %759 = vdwg.mxu0
        %v760 = vxor.u32 %v681, 2147483648
        %v761 = vxor.u32 %v683, 2147483648
        %v762 = vxor.u32 %v686, 2147483648
        %v763 = vxor.u32 %v688, 2147483648
        %v764 = vxor.u32 %v691, 2147483648
        %v765 = vxor.u32 %v693, 2147483648
        %v766 = vxor.u32 %v696, 2147483648
        %v767 = vxor.u32 %v698, 2147483648
        %v768 = vxor.u32 %v701, 2147483648
        %v769 = vxor.u32 %v703, 2147483648
        %v770 = vxor.u32 %v706, 2147483648
        %v771 = vxor.u32 %v708, 2147483648
        %v772 = vxor.u32 %v711, 2147483648
        %v773 = vxor.u32 %v713, 2147483648
        %v774 = vxor.u32 %v716, 2147483648
        %v775 = vxor.u32 %v718, 2147483648
        %v776 = vxor.u32 %v721, 2147483648
        %v777 = vxor.u32 %v723, 2147483648
        %v778 = vxor.u32 %v726, 2147483648
        %v779 = vxor.u32 %v728, 2147483648
        %v780 = vxor.u32 %v731, 2147483648
        %v781 = vxor.u32 %v733, 2147483648
        %v782 = vxor.u32 %v736, 2147483648
        %v783 = vxor.u32 %v738, 2147483648
        %v784 = vxor.u32 %v741, 2147483648
        %v785 = vxor.u32 %v743, 2147483648
        %v786 = vxor.u32 %v746, 2147483648
        %v787 = vxor.u32 %v748, 2147483648
        %v788 = vxor.u32 %v751, 2147483648
        %v789 = vxor.u32 %v753, 2147483648
        %v790 = vxor.u32 %v756, 2147483648
        %v791 = vxor.u32 %v758, 2147483648
        %v792 = vmul.f32 %v760, 1.442695
        %v793 = vpow.pop %v792
        %v794 = vmul.f32 %v761, 1.442695
        %v795 = vpow.pop %v794
        %v796 = vmul.f32 %v762, 1.442695
        %v797 = vpow.pop %v796
        %v798 = vmul.f32 %v763, 1.442695
        %v799 = vpow.pop %v798
        %v800 = vmul.f32 %v764, 1.442695
        %v801 = vpow.pop %v800
        %v802 = vmul.f32 %v765, 1.442695
        %v803 = vpow.pop %v802
        %v804 = vmul.f32 %v766, 1.442695
        %v805 = vpow.pop %v804
        %v806 = vmul.f32 %v767, 1.442695
        %v807 = vpow.pop %v806
        %v808 = vmul.f32 %v768, 1.442695
        %v809 = vpow.pop %v808
        %v810 = vmul.f32 %v769, 1.442695
        %v811 = vpow.pop %v810
        %v812 = vmul.f32 %v770, 1.442695
        %v813 = vpow.pop %v812
        %v814 = vmul.f32 %v771, 1.442695
        %v815 = vpow.pop %v814
        %v816 = vmul.f32 %v772, 1.442695
        %v817 = vpow.pop %v816
        %v818 = vmul.f32 %v773, 1.442695
        %v819 = vpow.pop %v818
        %v820 = vmul.f32 %v774, 1.442695
        %v821 = vpow.pop %v820
        %v822 = vmul.f32 %v775, 1.442695
        %v823 = vpow.pop %v822
        %v824 = vmul.f32 %v776, 1.442695
        %v825 = vpow.pop %v824
        %v826 = vmul.f32 %v777, 1.442695
        %v827 = vpow.pop %v826
        %v828 = vmul.f32 %v778, 1.442695
        %v829 = vpow.pop %v828
        %v830 = vmul.f32 %v779, 1.442695
        %v831 = vpow.pop %v830
        %v832 = vmul.f32 %v780, 1.442695
        %v833 = vpow.pop %v832
        %v834 = vmul.f32 %v781, 1.442695
        %v835 = vpow.pop %v834
        %v836 = vmul.f32 %v782, 1.442695
        %v837 = vpow.pop %v836
        %v838 = vmul.f32 %v783, 1.442695
        %v839 = vpow.pop %v838
        %v840 = vmul.f32 %v784, 1.442695
        %v841 = vpow.pop %v840
        %v842 = vmul.f32 %v785, 1.442695
        %v843 = vpow.pop %v842
        %v844 = vmul.f32 %v786, 1.442695
        %v845 = vpow.pop %v844
        %v846 = vmul.f32 %v787, 1.442695
        %v847 = vpow.pop %v846
        %v848 = vmul.f32 %v788, 1.442695
        %v849 = vpow.pop %v848
        %v850 = vmul.f32 %v789, 1.442695
        %v851 = vpow.pop %v850
        %v852 = vmul.f32 %v790, 1.442695
        %v853 = vpow.pop %v852
        %v854 = vmul.f32 %v791, 1.442695
        %v855 = vpow.pop %v854
        %v856 = vadd.f32 %v793, 1.0
        %v857 = vadd.f32 %v795, 1.0
        %v858 = vadd.f32 %v797, 1.0
        %v859 = vadd.f32 %v799, 1.0
        %v860 = vadd.f32 %v801, 1.0
        %v861 = vadd.f32 %v803, 1.0
        %v862 = vadd.f32 %v805, 1.0
        %v863 = vadd.f32 %v807, 1.0
        %v864 = vadd.f32 %v809, 1.0
        %v865 = vadd.f32 %v811, 1.0
        %v866 = vadd.f32 %v813, 1.0
        %v867 = vadd.f32 %v815, 1.0
        %v868 = vadd.f32 %v817, 1.0
        %v869 = vadd.f32 %v819, 1.0
        %v870 = vadd.f32 %v821, 1.0
        %v871 = vadd.f32 %v823, 1.0
        %v872 = vadd.f32 %v825, 1.0
        %v873 = vadd.f32 %v827, 1.0
        %v874 = vadd.f32 %v829, 1.0
        %v875 = vadd.f32 %v831, 1.0
        %v876 = vadd.f32 %v833, 1.0
        %v877 = vadd.f32 %v835, 1.0
        %v878 = vadd.f32 %v837, 1.0
        %v879 = vadd.f32 %v839, 1.0
        %v880 = vadd.f32 %v841, 1.0
        %v881 = vadd.f32 %v843, 1.0
        %v882 = vadd.f32 %v845, 1.0
        %v883 = vadd.f32 %v847, 1.0
        %v884 = vadd.f32 %v849, 1.0
        %v885 = vadd.f32 %v851, 1.0
        %v886 = vadd.f32 %v853, 1.0
        %v887 = vadd.f32 %v855, 1.0
        %v888 = vrcp.pop %v856
        %v889 = vmul.f32 %v856, %v888
        %v890 = vsub.f32 1.0, %v889
        %v891 = vmul.f32 %v888, %v890
        %v892 = vadd.f32 %v888, %v891
        %vm893 = vweird.f32 %v856
        %vm894 = vweird.f32 %v888
        %vm895 = vmor %vm893, %vm894
        %v896 = vsel %vm895, %v888, %v892
        %v897 = vand.u32 2147483647, %v856
        %vm898 = vcmp.eq.f32.partialorder %v897, 8.507059e+37
        %v899 = vand.u32 %v856, 2147483648
        %v900 = vor.u32 1.1754944e-38, %v899
        %v901 = vsel %vm898, %v900, %v896
        %v902 = vmul.f32 1.0, %v901
        %v903 = vrcp.pop %v857
        %v904 = vmul.f32 %v857, %v903
        %v905 = vsub.f32 1.0, %v904
        %v906 = vmul.f32 %v903, %v905
        %v907 = vadd.f32 %v903, %v906
        %vm908 = vweird.f32 %v857
        %vm909 = vweird.f32 %v903
        %vm910 = vmor %vm908, %vm909
        %v911 = vsel %vm910, %v903, %v907
        %v912 = vand.u32 2147483647, %v857
        %vm913 = vcmp.eq.f32.partialorder %v912, 8.507059e+37
        %v914 = vand.u32 %v857, 2147483648
        %v915 = vor.u32 1.1754944e-38, %v914
        %v916 = vsel %vm913, %v915, %v911
        %v917 = vmul.f32 1.0, %v916
        %v918 = vrcp.pop %v858
        %v919 = vmul.f32 %v858, %v918
        %v920 = vsub.f32 1.0, %v919
        %v921 = vmul.f32 %v918, %v920
        %v922 = vadd.f32 %v918, %v921
        %vm923 = vweird.f32 %v858
        %vm924 = vweird.f32 %v918
        %vm925 = vmor %vm923, %vm924
        %v926 = vsel %vm925, %v918, %v922
        %v927 = vand.u32 2147483647, %v858
        %vm928 = vcmp.eq.f32.partialorder %v927, 8.507059e+37
        %v929 = vand.u32 %v858, 2147483648
        %v930 = vor.u32 1.1754944e-38, %v929
        %v931 = vsel %vm928, %v930, %v926
        %v932 = vmul.f32 1.0, %v931
        %v933 = vrcp.pop %v859
        %v934 = vmul.f32 %v859, %v933
        %v935 = vsub.f32 1.0, %v934
        %v936 = vmul.f32 %v933, %v935
        %v937 = vadd.f32 %v933, %v936
        %vm938 = vweird.f32 %v859
        %vm939 = vweird.f32 %v933
        %vm940 = vmor %vm938, %vm939
        %v941 = vsel %vm940, %v933, %v937
        %v942 = vand.u32 2147483647, %v859
        %vm943 = vcmp.eq.f32.partialorder %v942, 8.507059e+37
        %v944 = vand.u32 %v859, 2147483648
        %v945 = vor.u32 1.1754944e-38, %v944
        %v946 = vsel %vm943, %v945, %v941
        %v947 = vmul.f32 1.0, %v946
        %v948 = vrcp.pop %v860
        %v949 = vmul.f32 %v860, %v948
        %v950 = vsub.f32 1.0, %v949
        %v951 = vmul.f32 %v948, %v950
        %v952 = vadd.f32 %v948, %v951
        %vm953 = vweird.f32 %v860
        %vm954 = vweird.f32 %v948
        %vm955 = vmor %vm953, %vm954
        %v956 = vsel %vm955, %v948, %v952
        %v957 = vand.u32 2147483647, %v860
        %vm958 = vcmp.eq.f32.partialorder %v957, 8.507059e+37
        %v959 = vand.u32 %v860, 2147483648
        %v960 = vor.u32 1.1754944e-38, %v959
        %v961 = vsel %vm958, %v960, %v956
        %v962 = vmul.f32 1.0, %v961
        %v963 = vrcp.pop %v861
        %v964 = vmul.f32 %v861, %v963
        %v965 = vsub.f32 1.0, %v964
        %v966 = vmul.f32 %v963, %v965
        %v967 = vadd.f32 %v963, %v966
        %vm968 = vweird.f32 %v861
        %vm969 = vweird.f32 %v963
        %vm970 = vmor %vm968, %vm969
        %v971 = vsel %vm970, %v963, %v967
        %v972 = vand.u32 2147483647, %v861
        %vm973 = vcmp.eq.f32.partialorder %v972, 8.507059e+37
        %v974 = vand.u32 %v861, 2147483648
        %v975 = vor.u32 1.1754944e-38, %v974
        %v976 = vsel %vm973, %v975, %v971
        %v977 = vmul.f32 1.0, %v976
        %v978 = vrcp.pop %v862
        %v979 = vmul.f32 %v862, %v978
        %v980 = vsub.f32 1.0, %v979
        %v981 = vmul.f32 %v978, %v980
        %v982 = vadd.f32 %v978, %v981
        %vm983 = vweird.f32 %v862
        %vm984 = vweird.f32 %v978
        %vm985 = vmor %vm983, %vm984
        %v986 = vsel %vm985, %v978, %v982
        %v987 = vand.u32 2147483647, %v862
        %vm988 = vcmp.eq.f32.partialorder %v987, 8.507059e+37
        %v989 = vand.u32 %v862, 2147483648
        %v990 = vor.u32 1.1754944e-38, %v989
        %v991 = vsel %vm988, %v990, %v986
        %v992 = vmul.f32 1.0, %v991
        %v993 = vrcp.pop %v863
        %v994 = vmul.f32 %v863, %v993
        %v995 = vsub.f32 1.0, %v994
        %v996 = vmul.f32 %v993, %v995
        %v997 = vadd.f32 %v993, %v996
        %vm998 = vweird.f32 %v863
        %vm999 = vweird.f32 %v993
        %vm1000 = vmor %vm998, %vm999
        %v1001 = vsel %vm1000, %v993, %v997
        %v1002 = vand.u32 2147483647, %v863
        %vm1003 = vcmp.eq.f32.partialorder %v1002, 8.507059e+37
        %v1004 = vand.u32 %v863, 2147483648
        %v1005 = vor.u32 1.1754944e-38, %v1004
        %v1006 = vsel %vm1003, %v1005, %v1001
        %v1007 = vmul.f32 1.0, %v1006
        %v1008 = vrcp.pop %v864
        %v1009 = vmul.f32 %v864, %v1008
        %v1010 = vsub.f32 1.0, %v1009
        %v1011 = vmul.f32 %v1008, %v1010
        %v1012 = vadd.f32 %v1008, %v1011
        %vm1013 = vweird.f32 %v864
        %vm1014 = vweird.f32 %v1008
        %vm1015 = vmor %vm1013, %vm1014
        %v1016 = vsel %vm1015, %v1008, %v1012
        %v1017 = vand.u32 2147483647, %v864
        %vm1018 = vcmp.eq.f32.partialorder %v1017, 8.507059e+37
        %v1019 = vand.u32 %v864, 2147483648
        %v1020 = vor.u32 1.1754944e-38, %v1019
        %v1021 = vsel %vm1018, %v1020, %v1016
        %v1022 = vmul.f32 1.0, %v1021
        %v1023 = vrcp.pop %v865
        %v1024 = vmul.f32 %v865, %v1023
        %v1025 = vsub.f32 1.0, %v1024
        %v1026 = vmul.f32 %v1023, %v1025
        %v1027 = vadd.f32 %v1023, %v1026
        %vm1028 = vweird.f32 %v865
        %vm1029 = vweird.f32 %v1023
        %vm1030 = vmor %vm1028, %vm1029
        %v1031 = vsel %vm1030, %v1023, %v1027
        %v1032 = vand.u32 2147483647, %v865
        %vm1033 = vcmp.eq.f32.partialorder %v1032, 8.507059e+37
        %v1034 = vand.u32 %v865, 2147483648
        %v1035 = vor.u32 1.1754944e-38, %v1034
        %v1036 = vsel %vm1033, %v1035, %v1031
        %v1037 = vmul.f32 1.0, %v1036
        %v1038 = vrcp.pop %v866
        %v1039 = vmul.f32 %v866, %v1038
        %v1040 = vsub.f32 1.0, %v1039
        %v1041 = vmul.f32 %v1038, %v1040
        %v1042 = vadd.f32 %v1038, %v1041
        %vm1043 = vweird.f32 %v866
        %vm1044 = vweird.f32 %v1038
        %vm1045 = vmor %vm1043, %vm1044
        %v1046 = vsel %vm1045, %v1038, %v1042
        %v1047 = vand.u32 2147483647, %v866
        %vm1048 = vcmp.eq.f32.partialorder %v1047, 8.507059e+37
        %v1049 = vand.u32 %v866, 2147483648
        %v1050 = vor.u32 1.1754944e-38, %v1049
        %v1051 = vsel %vm1048, %v1050, %v1046
        %v1052 = vmul.f32 1.0, %v1051
        %v1053 = vrcp.pop %v867
        %v1054 = vmul.f32 %v867, %v1053
        %v1055 = vsub.f32 1.0, %v1054
        %v1056 = vmul.f32 %v1053, %v1055
        %v1057 = vadd.f32 %v1053, %v1056
        %vm1058 = vweird.f32 %v867
        %vm1059 = vweird.f32 %v1053
        %vm1060 = vmor %vm1058, %vm1059
        %v1061 = vsel %vm1060, %v1053, %v1057
        %v1062 = vand.u32 2147483647, %v867
        %vm1063 = vcmp.eq.f32.partialorder %v1062, 8.507059e+37
        %v1064 = vand.u32 %v867, 2147483648
        %v1065 = vor.u32 1.1754944e-38, %v1064
        %v1066 = vsel %vm1063, %v1065, %v1061
        %v1067 = vmul.f32 1.0, %v1066
        %v1068 = vrcp.pop %v868
        %v1069 = vmul.f32 %v868, %v1068
        %v1070 = vsub.f32 1.0, %v1069
        %v1071 = vmul.f32 %v1068, %v1070
        %v1072 = vadd.f32 %v1068, %v1071
        %vm1073 = vweird.f32 %v868
        %vm1074 = vweird.f32 %v1068
        %vm1075 = vmor %vm1073, %vm1074
        %v1076 = vsel %vm1075, %v1068, %v1072
        %v1077 = vand.u32 2147483647, %v868
        %vm1078 = vcmp.eq.f32.partialorder %v1077, 8.507059e+37
        %v1079 = vand.u32 %v868, 2147483648
        %v1080 = vor.u32 1.1754944e-38, %v1079
        %v1081 = vsel %vm1078, %v1080, %v1076
        %v1082 = vmul.f32 1.0, %v1081
        %v1083 = vrcp.pop %v869
        %v1084 = vmul.f32 %v869, %v1083
        %v1085 = vsub.f32 1.0, %v1084
        %v1086 = vmul.f32 %v1083, %v1085
        %v1087 = vadd.f32 %v1083, %v1086
        %vm1088 = vweird.f32 %v869
        %vm1089 = vweird.f32 %v1083
        %vm1090 = vmor %vm1088, %vm1089
        %v1091 = vsel %vm1090, %v1083, %v1087
        %v1092 = vand.u32 2147483647, %v869
        %vm1093 = vcmp.eq.f32.partialorder %v1092, 8.507059e+37
        %v1094 = vand.u32 %v869, 2147483648
        %v1095 = vor.u32 1.1754944e-38, %v1094
        %v1096 = vsel %vm1093, %v1095, %v1091
        %v1097 = vmul.f32 1.0, %v1096
        %v1098 = vrcp.pop %v870
        %v1099 = vmul.f32 %v870, %v1098
        %v1100 = vsub.f32 1.0, %v1099
        %v1101 = vmul.f32 %v1098, %v1100
        %v1102 = vadd.f32 %v1098, %v1101
        %vm1103 = vweird.f32 %v870
        %vm1104 = vweird.f32 %v1098
        %vm1105 = vmor %vm1103, %vm1104
        %v1106 = vsel %vm1105, %v1098, %v1102
        %v1107 = vand.u32 2147483647, %v870
        %vm1108 = vcmp.eq.f32.partialorder %v1107, 8.507059e+37
        %v1109 = vand.u32 %v870, 2147483648
        %v1110 = vor.u32 1.1754944e-38, %v1109
        %v1111 = vsel %vm1108, %v1110, %v1106
        %v1112 = vmul.f32 1.0, %v1111
        %v1113 = vrcp.pop %v871
        %v1114 = vmul.f32 %v871, %v1113
        %v1115 = vsub.f32 1.0, %v1114
        %v1116 = vmul.f32 %v1113, %v1115
        %v1117 = vadd.f32 %v1113, %v1116
        %vm1118 = vweird.f32 %v871
        %vm1119 = vweird.f32 %v1113
        %vm1120 = vmor %vm1118, %vm1119
        %v1121 = vsel %vm1120, %v1113, %v1117
        %v1122 = vand.u32 2147483647, %v871
        %vm1123 = vcmp.eq.f32.partialorder %v1122, 8.507059e+37
        %v1124 = vand.u32 %v871, 2147483648
        %v1125 = vor.u32 1.1754944e-38, %v1124
        %v1126 = vsel %vm1123, %v1125, %v1121
        %v1127 = vmul.f32 1.0, %v1126
        %v1128 = vrcp.pop %v872
        %v1129 = vmul.f32 %v872, %v1128
        %v1130 = vsub.f32 1.0, %v1129
        %v1131 = vmul.f32 %v1128, %v1130
        %v1132 = vadd.f32 %v1128, %v1131
        %vm1133 = vweird.f32 %v872
        %vm1134 = vweird.f32 %v1128
        %vm1135 = vmor %vm1133, %vm1134
        %v1136 = vsel %vm1135, %v1128, %v1132
        %v1137 = vand.u32 2147483647, %v872
        %vm1138 = vcmp.eq.f32.partialorder %v1137, 8.507059e+37
        %v1139 = vand.u32 %v872, 2147483648
        %v1140 = vor.u32 1.1754944e-38, %v1139
        %v1141 = vsel %vm1138, %v1140, %v1136
        %v1142 = vmul.f32 1.0, %v1141
        %v1143 = vrcp.pop %v873
        %v1144 = vmul.f32 %v873, %v1143
        %v1145 = vsub.f32 1.0, %v1144
        %v1146 = vmul.f32 %v1143, %v1145
        %v1147 = vadd.f32 %v1143, %v1146
        %vm1148 = vweird.f32 %v873
        %vm1149 = vweird.f32 %v1143
        %vm1150 = vmor %vm1148, %vm1149
        %v1151 = vsel %vm1150, %v1143, %v1147
        %v1152 = vand.u32 2147483647, %v873
        %vm1153 = vcmp.eq.f32.partialorder %v1152, 8.507059e+37
        %v1154 = vand.u32 %v873, 2147483648
        %v1155 = vor.u32 1.1754944e-38, %v1154
        %v1156 = vsel %vm1153, %v1155, %v1151
        %v1157 = vmul.f32 1.0, %v1156
        %v1158 = vrcp.pop %v874
        %v1159 = vmul.f32 %v874, %v1158
        %v1160 = vsub.f32 1.0, %v1159
        %v1161 = vmul.f32 %v1158, %v1160
        %v1162 = vadd.f32 %v1158, %v1161
        %vm1163 = vweird.f32 %v874
        %vm1164 = vweird.f32 %v1158
        %vm1165 = vmor %vm1163, %vm1164
        %v1166 = vsel %vm1165, %v1158, %v1162
        %v1167 = vand.u32 2147483647, %v874
        %vm1168 = vcmp.eq.f32.partialorder %v1167, 8.507059e+37
        %v1169 = vand.u32 %v874, 2147483648
        %v1170 = vor.u32 1.1754944e-38, %v1169
        %v1171 = vsel %vm1168, %v1170, %v1166
        %v1172 = vmul.f32 1.0, %v1171
        %v1173 = vrcp.pop %v875
        %v1174 = vmul.f32 %v875, %v1173
        %v1175 = vsub.f32 1.0, %v1174
        %v1176 = vmul.f32 %v1173, %v1175
        %v1177 = vadd.f32 %v1173, %v1176
        %vm1178 = vweird.f32 %v875
        %vm1179 = vweird.f32 %v1173
        %vm1180 = vmor %vm1178, %vm1179
        %v1181 = vsel %vm1180, %v1173, %v1177
        %v1182 = vand.u32 2147483647, %v875
        %vm1183 = vcmp.eq.f32.partialorder %v1182, 8.507059e+37
        %v1184 = vand.u32 %v875, 2147483648
        %v1185 = vor.u32 1.1754944e-38, %v1184
        %v1186 = vsel %vm1183, %v1185, %v1181
        %v1187 = vmul.f32 1.0, %v1186
        %v1188 = vrcp.pop %v876
        %v1189 = vmul.f32 %v876, %v1188
        %v1190 = vsub.f32 1.0, %v1189
        %v1191 = vmul.f32 %v1188, %v1190
        %v1192 = vadd.f32 %v1188, %v1191
        %vm1193 = vweird.f32 %v876
        %vm1194 = vweird.f32 %v1188
        %vm1195 = vmor %vm1193, %vm1194
        %v1196 = vsel %vm1195, %v1188, %v1192
        %v1197 = vand.u32 2147483647, %v876
        %vm1198 = vcmp.eq.f32.partialorder %v1197, 8.507059e+37
        %v1199 = vand.u32 %v876, 2147483648
        %v1200 = vor.u32 1.1754944e-38, %v1199
        %v1201 = vsel %vm1198, %v1200, %v1196
        %v1202 = vmul.f32 1.0, %v1201
        %v1203 = vrcp.pop %v877
        %v1204 = vmul.f32 %v877, %v1203
        %v1205 = vsub.f32 1.0, %v1204
        %v1206 = vmul.f32 %v1203, %v1205
        %v1207 = vadd.f32 %v1203, %v1206
        %vm1208 = vweird.f32 %v877
        %vm1209 = vweird.f32 %v1203
        %vm1210 = vmor %vm1208, %vm1209
        %v1211 = vsel %vm1210, %v1203, %v1207
        %v1212 = vand.u32 2147483647, %v877
        %vm1213 = vcmp.eq.f32.partialorder %v1212, 8.507059e+37
        %v1214 = vand.u32 %v877, 2147483648
        %v1215 = vor.u32 1.1754944e-38, %v1214
        %v1216 = vsel %vm1213, %v1215, %v1211
        %v1217 = vmul.f32 1.0, %v1216
        %v1218 = vrcp.pop %v878
        %v1219 = vmul.f32 %v878, %v1218
        %v1220 = vsub.f32 1.0, %v1219
        %v1221 = vmul.f32 %v1218, %v1220
        %v1222 = vadd.f32 %v1218, %v1221
        %vm1223 = vweird.f32 %v878
        %vm1224 = vweird.f32 %v1218
        %vm1225 = vmor %vm1223, %vm1224
        %v1226 = vsel %vm1225, %v1218, %v1222
        %v1227 = vand.u32 2147483647, %v878
        %vm1228 = vcmp.eq.f32.partialorder %v1227, 8.507059e+37
        %v1229 = vand.u32 %v878, 2147483648
        %v1230 = vor.u32 1.1754944e-38, %v1229
        %v1231 = vsel %vm1228, %v1230, %v1226
        %v1232 = vmul.f32 1.0, %v1231
        %v1233 = vrcp.pop %v879
        %v1234 = vmul.f32 %v879, %v1233
        %v1235 = vsub.f32 1.0, %v1234
        %v1236 = vmul.f32 %v1233, %v1235
        %v1237 = vadd.f32 %v1233, %v1236
        %vm1238 = vweird.f32 %v879
        %vm1239 = vweird.f32 %v1233
        %vm1240 = vmor %vm1238, %vm1239
        %v1241 = vsel %vm1240, %v1233, %v1237
        %v1242 = vand.u32 2147483647, %v879
        %vm1243 = vcmp.eq.f32.partialorder %v1242, 8.507059e+37
        %v1244 = vand.u32 %v879, 2147483648
        %v1245 = vor.u32 1.1754944e-38, %v1244
        %v1246 = vsel %vm1243, %v1245, %v1241
        %v1247 = vmul.f32 1.0, %v1246
        %v1248 = vrcp.pop %v880
        %v1249 = vmul.f32 %v880, %v1248
        %v1250 = vsub.f32 1.0, %v1249
        %v1251 = vmul.f32 %v1248, %v1250
        %v1252 = vadd.f32 %v1248, %v1251
        %vm1253 = vweird.f32 %v880
        %vm1254 = vweird.f32 %v1248
        %vm1255 = vmor %vm1253, %vm1254
        %v1256 = vsel %vm1255, %v1248, %v1252
        %v1257 = vand.u32 2147483647, %v880
        %vm1258 = vcmp.eq.f32.partialorder %v1257, 8.507059e+37
        %v1259 = vand.u32 %v880, 2147483648
        %v1260 = vor.u32 1.1754944e-38, %v1259
        %v1261 = vsel %vm1258, %v1260, %v1256
        %v1262 = vmul.f32 1.0, %v1261
        %v1263 = vrcp.pop %v881
        %v1264 = vmul.f32 %v881, %v1263
        %v1265 = vsub.f32 1.0, %v1264
        %v1266 = vmul.f32 %v1263, %v1265
        %v1267 = vadd.f32 %v1263, %v1266
        %vm1268 = vweird.f32 %v881
        %vm1269 = vweird.f32 %v1263
        %vm1270 = vmor %vm1268, %vm1269
        %v1271 = vsel %vm1270, %v1263, %v1267
        %v1272 = vand.u32 2147483647, %v881
        %vm1273 = vcmp.eq.f32.partialorder %v1272, 8.507059e+37
        %v1274 = vand.u32 %v881, 2147483648
        %v1275 = vor.u32 1.1754944e-38, %v1274
        %v1276 = vsel %vm1273, %v1275, %v1271
        %v1277 = vmul.f32 1.0, %v1276
        %v1278 = vrcp.pop %v882
        %v1279 = vmul.f32 %v882, %v1278
        %v1280 = vsub.f32 1.0, %v1279
        %v1281 = vmul.f32 %v1278, %v1280
        %v1282 = vadd.f32 %v1278, %v1281
        %vm1283 = vweird.f32 %v882
        %vm1284 = vweird.f32 %v1278
        %vm1285 = vmor %vm1283, %vm1284
        %v1286 = vsel %vm1285, %v1278, %v1282
        %v1287 = vand.u32 2147483647, %v882
        %vm1288 = vcmp.eq.f32.partialorder %v1287, 8.507059e+37
        %v1289 = vand.u32 %v882, 2147483648
        %v1290 = vor.u32 1.1754944e-38, %v1289
        %v1291 = vsel %vm1288, %v1290, %v1286
        %v1292 = vmul.f32 1.0, %v1291
        %v1293 = vrcp.pop %v883
        %v1294 = vmul.f32 %v883, %v1293
        %v1295 = vsub.f32 1.0, %v1294
        %v1296 = vmul.f32 %v1293, %v1295
        %v1297 = vadd.f32 %v1293, %v1296
        %vm1298 = vweird.f32 %v883
        %vm1299 = vweird.f32 %v1293
        %vm1300 = vmor %vm1298, %vm1299
        %v1301 = vsel %vm1300, %v1293, %v1297
        %v1302 = vand.u32 2147483647, %v883
        %vm1303 = vcmp.eq.f32.partialorder %v1302, 8.507059e+37
        %v1304 = vand.u32 %v883, 2147483648
        %v1305 = vor.u32 1.1754944e-38, %v1304
        %v1306 = vsel %vm1303, %v1305, %v1301
        %v1307 = vmul.f32 1.0, %v1306
        %v1308 = vrcp.pop %v884
        %v1309 = vmul.f32 %v884, %v1308
        %v1310 = vsub.f32 1.0, %v1309
        %v1311 = vmul.f32 %v1308, %v1310
        %v1312 = vadd.f32 %v1308, %v1311
        %vm1313 = vweird.f32 %v884
        %vm1314 = vweird.f32 %v1308
        %vm1315 = vmor %vm1313, %vm1314
        %v1316 = vsel %vm1315, %v1308, %v1312
        %v1317 = vand.u32 2147483647, %v884
        %vm1318 = vcmp.eq.f32.partialorder %v1317, 8.507059e+37
        %v1319 = vand.u32 %v884, 2147483648
        %v1320 = vor.u32 1.1754944e-38, %v1319
        %v1321 = vsel %vm1318, %v1320, %v1316
        %v1322 = vmul.f32 1.0, %v1321
        %v1323 = vrcp.pop %v885
        %v1324 = vmul.f32 %v885, %v1323
        %v1325 = vsub.f32 1.0, %v1324
        %v1326 = vmul.f32 %v1323, %v1325
        %v1327 = vadd.f32 %v1323, %v1326
        %vm1328 = vweird.f32 %v885
        %vm1329 = vweird.f32 %v1323
        %vm1330 = vmor %vm1328, %vm1329
        %v1331 = vsel %vm1330, %v1323, %v1327
        %v1332 = vand.u32 2147483647, %v885
        %vm1333 = vcmp.eq.f32.partialorder %v1332, 8.507059e+37
        %v1334 = vand.u32 %v885, 2147483648
        %v1335 = vor.u32 1.1754944e-38, %v1334
        %v1336 = vsel %vm1333, %v1335, %v1331
        %v1337 = vmul.f32 1.0, %v1336
        %v1338 = vrcp.pop %v886
        %v1339 = vmul.f32 %v886, %v1338
        %v1340 = vsub.f32 1.0, %v1339
        %v1341 = vmul.f32 %v1338, %v1340
        %v1342 = vadd.f32 %v1338, %v1341
        %vm1343 = vweird.f32 %v886
        %vm1344 = vweird.f32 %v1338
        %vm1345 = vmor %vm1343, %vm1344
        %v1346 = vsel %vm1345, %v1338, %v1342
        %v1347 = vand.u32 2147483647, %v886
        %vm1348 = vcmp.eq.f32.partialorder %v1347, 8.507059e+37
        %v1349 = vand.u32 %v886, 2147483648
        %v1350 = vor.u32 1.1754944e-38, %v1349
        %v1351 = vsel %vm1348, %v1350, %v1346
        %v1352 = vmul.f32 1.0, %v1351
        %v1353 = vrcp.pop %v887
        %v1354 = vmul.f32 %v887, %v1353
        %v1355 = vsub.f32 1.0, %v1354
        %v1356 = vmul.f32 %v1353, %v1355
        %v1357 = vadd.f32 %v1353, %v1356
        %vm1358 = vweird.f32 %v887
        %vm1359 = vweird.f32 %v1353
        %vm1360 = vmor %vm1358, %vm1359
        %v1361 = vsel %vm1360, %v1353, %v1357
        %v1362 = vand.u32 2147483647, %v887
        %vm1363 = vcmp.eq.f32.partialorder %v1362, 8.507059e+37
        %v1364 = vand.u32 %v887, 2147483648
        %v1365 = vor.u32 1.1754944e-38, %v1364
        %v1366 = vsel %vm1363, %v1365, %v1361
        %v1367 = vmul.f32 1.0, %v1366
        %v1368 = vunpack.c.l.bf16 %v269
        %v1369 = vunpack.c.l.bf16 %v270
        %v1370 = vunpack.c.l.bf16 %v271
        %v1371 = vunpack.c.l.bf16 %v272
        %v1372 = vunpack.c.l.bf16 %v273
        %v1373 = vunpack.c.l.bf16 %v274
        %v1374 = vunpack.c.l.bf16 %v275
        %v1375 = vunpack.c.l.bf16 %v276
        %v1376 = vunpack.c.l.bf16 %v277
        %v1377 = vunpack.c.l.bf16 %v278
        %v1378 = vunpack.c.l.bf16 %v279
        %v1379 = vunpack.c.l.bf16 %v280
        %v1380 = vunpack.c.l.bf16 %v281
        %v1381 = vunpack.c.l.bf16 %v282
        %v1382 = vunpack.c.l.bf16 %v283
        %v1383 = vunpack.c.l.bf16 %v284
        %v1384 = vunpack.c.l.bf16 %v285
        %v1385 = vunpack.c.l.bf16 %v286
        %v1386 = vunpack.c.l.bf16 %v287
        %v1387 = vunpack.c.l.bf16 %v288
        %v1388 = vunpack.c.l.bf16 %v289
        %v1389 = vunpack.c.l.bf16 %v290
        %v1390 = vunpack.c.l.bf16 %v291
        %v1391 = vunpack.c.l.bf16 %v292
        %v1392 = vunpack.c.l.bf16 %v293
        %v1393 = vunpack.c.l.bf16 %v294
        %v1394 = vunpack.c.l.bf16 %v295
        %v1395 = vunpack.c.l.bf16 %v296
        %v1396 = vunpack.c.l.bf16 %v297
        %v1397 = vunpack.c.l.bf16 %v298
        %v1398 = vunpack.c.l.bf16 %v299
        %v1399 = vunpack.c.l.bf16 %v300
        %v1400 = vmul.f32 %v1368, %v902
        %v1401 = vmul.f32 %v1369, %v917
        %v1402 = vmul.f32 %v1370, %v932
        %v1403 = vmul.f32 %v1371, %v947
        %v1404 = vmul.f32 %v1372, %v962
        %v1405 = vmul.f32 %v1373, %v977
        %v1406 = vmul.f32 %v1374, %v992
        %v1407 = vmul.f32 %v1375, %v1007
        %v1408 = vmul.f32 %v1376, %v1022
        %v1409 = vmul.f32 %v1377, %v1037
        %v1410 = vmul.f32 %v1378, %v1052
        %v1411 = vmul.f32 %v1379, %v1067
        %v1412 = vmul.f32 %v1380, %v1082
        %v1413 = vmul.f32 %v1381, %v1097
        %v1414 = vmul.f32 %v1382, %v1112
        %v1415 = vmul.f32 %v1383, %v1127
        %v1416 = vmul.f32 %v1384, %v1142
        %v1417 = vmul.f32 %v1385, %v1157
        %v1418 = vmul.f32 %v1386, %v1172
        %v1419 = vmul.f32 %v1387, %v1187
        %v1420 = vmul.f32 %v1388, %v1202
        %v1421 = vmul.f32 %v1389, %v1217
        %v1422 = vmul.f32 %v1390, %v1232
        %v1423 = vmul.f32 %v1391, %v1247
        %v1424 = vmul.f32 %v1392, %v1262
        %v1425 = vmul.f32 %v1393, %v1277
        %v1426 = vmul.f32 %v1394, %v1292
        %v1427 = vmul.f32 %v1395, %v1307
        %v1428 = vmul.f32 %v1396, %v1322
        %v1429 = vmul.f32 %v1397, %v1337
        %v1430 = vmul.f32 %v1398, %v1352
        %v1431 = vmul.f32 %v1399, %v1367
        %v1432 = vpack.c.bf16 %v1400, %v1400
        %v1433 = vpack.c.bf16 %v1401, %v1401
        %v1434 = vpack.c.bf16 %v1402, %v1402
        %v1435 = vpack.c.bf16 %v1403, %v1403
        %v1436 = vpack.c.bf16 %v1404, %v1404
        %v1437 = vpack.c.bf16 %v1405, %v1405
        %v1438 = vpack.c.bf16 %v1406, %v1406
        %v1439 = vpack.c.bf16 %v1407, %v1407
        %v1440 = vpack.c.bf16 %v1408, %v1408
        %v1441 = vpack.c.bf16 %v1409, %v1409
        %v1442 = vpack.c.bf16 %v1410, %v1410
        %v1443 = vpack.c.bf16 %v1411, %v1411
        %v1444 = vpack.c.bf16 %v1412, %v1412
        %v1445 = vpack.c.bf16 %v1413, %v1413
        %v1446 = vpack.c.bf16 %v1414, %v1414
        %v1447 = vpack.c.bf16 %v1415, %v1415
        %v1448 = vpack.c.bf16 %v1416, %v1416
        %v1449 = vpack.c.bf16 %v1417, %v1417
        %v1450 = vpack.c.bf16 %v1418, %v1418
        %v1451 = vpack.c.bf16 %v1419, %v1419
        %v1452 = vpack.c.bf16 %v1420, %v1420
        %v1453 = vpack.c.bf16 %v1421, %v1421
        %v1454 = vpack.c.bf16 %v1422, %v1422
        %v1455 = vpack.c.bf16 %v1423, %v1423
        %v1456 = vpack.c.bf16 %v1424, %v1424
        %v1457 = vpack.c.bf16 %v1425, %v1425
        %v1458 = vpack.c.bf16 %v1426, %v1426
        %v1459 = vpack.c.bf16 %v1427, %v1427
        %v1460 = vpack.c.bf16 %v1428, %v1428
        %v1461 = vpack.c.bf16 %v1429, %v1429
        %v1462 = vpack.c.bf16 %v1430, %v1430
        %v1463 = vpack.c.bf16 %v1431, %v1431
        %vm1464 = vcmask 519168
        %1465 = vst.msk [vmem:[%s253] sm:$0xf] %vm1464, %v1432
        %1466 = vst.msk [vmem:[%s253 + $0x4] sm:$0xf] %vm1464, %v1433
        %1467 = vst.msk [vmem:[%s253 + $0x8] sm:$0xf] %vm1464, %v1434
        %1468 = vst.msk [vmem:[%s253 + $0xc] sm:$0xf] %vm1464, %v1435
        %1469 = vst.msk [vmem:[%s253 + $0x10] sm:$0xf] %vm1464, %v1436
        %1470 = vst.msk [vmem:[%s253 + $0x14] sm:$0xf] %vm1464, %v1437
        %1471 = vst.msk [vmem:[%s253 + $0x18] sm:$0xf] %vm1464, %v1438
        %1472 = vst.msk [vmem:[%s253 + $0x1c] sm:$0xf] %vm1464, %v1439
        %1473 = vst.msk [vmem:[%s253 + $0x20] sm:$0xf] %vm1464, %v1440
        %1474 = vst.msk [vmem:[%s253 + $0x24] sm:$0xf] %vm1464, %v1441
        %1475 = vst.msk [vmem:[%s253 + $0x28] sm:$0xf] %vm1464, %v1442
        %1476 = vst.msk [vmem:[%s253 + $0x2c] sm:$0xf] %vm1464, %v1443
        %1477 = vst.msk [vmem:[%s253 + $0x30] sm:$0xf] %vm1464, %v1444
        %1478 = vst.msk [vmem:[%s253 + $0x34] sm:$0xf] %vm1464, %v1445
        %1479 = vst.msk [vmem:[%s253 + $0x38] sm:$0xf] %vm1464, %v1446
        %1480 = vst.msk [vmem:[%s253 + $0x3c] sm:$0xf] %vm1464, %v1447
        %1481 = vst.msk [vmem:[%s253 + $0x40] sm:$0xf] %vm1464, %v1448
        %1482 = vst.msk [vmem:[%s253 + $0x44] sm:$0xf] %vm1464, %v1449
        %1483 = vst.msk [vmem:[%s253 + $0x48] sm:$0xf] %vm1464, %v1450
        %1484 = vst.msk [vmem:[%s253 + $0x4c] sm:$0xf] %vm1464, %v1451
        %1485 = vst.msk [vmem:[%s253 + $0x50] sm:$0xf] %vm1464, %v1452
        %1486 = vst.msk [vmem:[%s253 + $0x54] sm:$0xf] %vm1464, %v1453
        %1487 = vst.msk [vmem:[%s253 + $0x58] sm:$0xf] %vm1464, %v1454
        %1488 = vst.msk [vmem:[%s253 + $0x5c] sm:$0xf] %vm1464, %v1455
        %1489 = vst.msk [vmem:[%s253 + $0x60] sm:$0xf] %vm1464, %v1456
        %1490 = vst.msk [vmem:[%s253 + $0x64] sm:$0xf] %vm1464, %v1457
        %1491 = vst.msk [vmem:[%s253 + $0x68] sm:$0xf] %vm1464, %v1458
        %1492 = vst.msk [vmem:[%s253 + $0x6c] sm:$0xf] %vm1464, %v1459
        %1493 = vst.msk [vmem:[%s253 + $0x70] sm:$0xf] %vm1464, %v1460
        %1494 = vst.msk [vmem:[%s253 + $0x74] sm:$0xf] %vm1464, %v1461
        %1495 = vst.msk [vmem:[%s253 + $0x78] sm:$0xf] %vm1464, %v1462
        %1496 = vst.msk [vmem:[%s253 + $0x7c] sm:$0xf] %vm1464, %v1463
        %s1497 = sand.u32 %s158, 1
        %s1498 = scalar_lea.sflag [#allocation3], %s1497
        %s1499 = sand.u32 %s158, 1
        %s1500 = smul.addr %s1499, 128
        %s1501 = scalar_lea.vmem [#allocation2], %s1500
        // Predicated region
        $region41: #{ms_cam_forward.1} parent=39 // pred_check
          %p1502 = pneg %p168
        $region42: #{ms_cam_forward.1} parent=39 // pred_check_branch
          %1504 = sbr.rel (%p1502) target = $region44
        $region43: #{ms_cam_forward.1} parent=39 // pred_region
          %s1505 = smul.u32 32, %s24
          %1507 = vsyncadd %s1498, 0
          %s1508 = smul.addr %s23, 32
          %s1509 = sadd.s32 %s1505, %s1508
          %s1510 = smul.addr %s1509, 4
          %s1511 = scalar_lea.hbm %s5, %s1510
          %s1512 = sshll.u32 %s1501, 4
          %s1513 = int_to_ptr.vmem [resolvable:$true] %s1512
          %s1514 = sshll.u32 %s1511, 4
          %s1515 = int_to_ptr.hbm [resolvable:$true] %s1514
          %1520 = dma.vmem_to_hbm [thread:$0]  %s1513, 2048, %s1515, %s1498, 64, 64, 4
        $region44: #{ms_cam_forward.1} parent=39 // pred_fallthru
          _
      $region40: #{ms_cam_forward.1} parent=5 // pred_fallthru
        _
      %p1521 = scmp.le.s32.totalorder 2, %s14
      // Predicated region
      $region45: #{ms_cam_forward.1} parent=5 // pred_check
        %p1522 = pneg %p1521
      $region46: #{ms_cam_forward.1} parent=5 // pred_check_branch
        %1524 = sbr.rel (%p1522) target = $region48
      $region47: #{ms_cam_forward.1} parent=5 // pred_region
        %s1525 = ssub.s32 %s14, 2
        // Predicated region
        $region49: #{ms_cam_forward.1} parent=47 // pred_check
          %p1526 = pneg %p174
        $region50: #{ms_cam_forward.1} parent=47 // pred_check_branch
          %1528 = sbr.rel (%p1526) target = $region52
        $region51: #{ms_cam_forward.1} parent=47 // pred_region
          %s1529 = sand.u32 %s159, 1
          %s1530 = scalar_lea.sflag [#allocation3], %s1529
          %s1531 = sand.u32 %s159, 1
          %s1532 = smul.addr %s1531, 128
          %s1533 = scalar_lea.vmem [#allocation2], %s1532
          %1535 = dma.done %s1530, 2048
        $region52: #{ms_cam_forward.1} parent=47 // pred_fallthru
          _
      $region48: #{ms_cam_forward.1} parent=5 // pred_fallthru
        _
    $region6: #{ms_cam_forward.1} parent=1 // loop_footer
      %s18 = sadd.s32 1, %s14
    $region7: #{ms_cam_forward.1} parent=1 // loop_footer_branch
      %13 = sbr.rel target = $region3
    $region8: #{ms_cam_forward.1} parent=1 // loop_exit
      _
    %1536 = vsyncpa [#allocation3], 1
    %s1537 = scalar_lea.sflag [#allocation3], 1
    %1538 = vsyncpa %s1537, 1

</llo_original>
